<compile_context>
chip_gen: v7x
topology: tpu7x:2x2x1
jax: 0.10.0
libtpu: 0.0.40
codegen_flags: <defaults>
</compile_context>

<pallas_src>
import functools

import jax
import jax.numpy as jnp
from jax.experimental import pallas as pl
from jax.experimental.pallas import tpu as pltpu

BN_EPS = 1e-5
NEG = -1e30  # finite stand-in for -inf pool padding (pool inputs are >= 0)


# ---------------------------------------------------------------------------
# Pallas kernel 1: fused matmul + per-channel scale/shift + activation (MXU)
# ---------------------------------------------------------------------------
def _matmul_scale_act_kernel(x_ref, w_ref, s_ref, b_ref, o_ref, *, act):
    acc = jnp.dot(x_ref[...], w_ref[...], preferred_element_type=jnp.float32)
    acc = acc * s_ref[...] + b_ref[...]
    if act == "relu":
        acc = jnp.maximum(acc, 0.0)
    elif act == "sigmoid":
        acc = jax.nn.sigmoid(acc)
    o_ref[...] = acc


def matmul_scale_act(x, w, scale, shift, act="none", tm=512):
    """out = act(x @ w * scale + shift); bf16 MXU operands, f32 accumulate."""
    M0, K = x.shape
    K2, N = w.shape
    assert K == K2
    M = M0
    if M < 8:  # tiny rows (e.g. batch=2 fc): pad to one sublane tile
        x = jnp.pad(x, ((0, 8 - M), (0, 0)))
        M = 8
    block_m = M if M <= tm else tm
    grid_m = pl.cdiv(M, block_m)
    x_bf = x.astype(jnp.bfloat16)
    w_bf = w.astype(jnp.bfloat16)
    cost = pl.CostEstimate(
        flops=2 * M * K * N,
        transcendentals=(M * N if act == "sigmoid" else 0),
        bytes_accessed=int(M * K * 2 + K * N * 2 + M * N * 4),
    )
    out = pl.pallas_call(
        functools.partial(_matmul_scale_act_kernel, act=act),
        out_shape=jax.ShapeDtypeStruct((M, N), jnp.float32),
        grid=(grid_m,),
        in_specs=[
            pl.BlockSpec((block_m, K), lambda i: (i, 0)),
            pl.BlockSpec((K, N), lambda i: (0, 0)),
            pl.BlockSpec((1, N), lambda i: (0, 0)),
            pl.BlockSpec((1, N), lambda i: (0, 0)),
        ],
        out_specs=pl.BlockSpec((block_m, N), lambda i: (i, 0)),
        compiler_params=pltpu.CompilerParams(dimension_semantics=("parallel",)),
        cost_estimate=cost,
    )(x_bf, w_bf,
      scale.reshape(1, N).astype(jnp.float32),
      shift.reshape(1, N).astype(jnp.float32))
    return out[:M0] if M0 != M else out


# ---------------------------------------------------------------------------
# Pallas kernel 2: tiled element-wise max of k shifted slices (pooling core)
# ---------------------------------------------------------------------------
def _max_kernel(*refs):
    o_ref = refs[-1]
    acc = refs[0][...]
    for r in refs[1:-1]:
        acc = jnp.maximum(acc, r[...])
    o_ref[...] = acc


def elementwise_max(arrays, row_block=512):
    shp = arrays[0].shape
    C = shp[-1]
    M = 1
    for d in shp[:-1]:
        M *= int(d)
    flat = [a.reshape(M, C) for a in arrays]
    bm = M if M <= row_block else row_block
    out = pl.pallas_call(
        _max_kernel,
        out_shape=jax.ShapeDtypeStruct((M, C), arrays[0].dtype),
        grid=(pl.cdiv(M, bm),),
        in_specs=[pl.BlockSpec((bm, C), lambda i: (i, 0)) for _ in flat],
        out_specs=pl.BlockSpec((bm, C), lambda i: (i, 0)),
        compiler_params=pltpu.CompilerParams(dimension_semantics=("parallel",)),
    )(*flat)
    return out.reshape(shp)


# ---------------------------------------------------------------------------
# Pallas kernel 3: tiled spatial mean (lane-dense (B, C) output, accumulated)
# ---------------------------------------------------------------------------
def _mean_kernel(x_ref, o_ref, *, inv_n):
    j = pl.program_id(1)

    @pl.when(j == 0)
    def _():
        o_ref[...] = jnp.zeros_like(o_ref)

    o_ref[...] += jnp.sum(x_ref[...], axis=1, keepdims=True)

    @pl.when(j == pl.num_programs(1) - 1)
    def _():
        o_ref[...] *= inv_n


def spatial_mean(x_cl, chunk_target=1024):
    """(N, T, H, W, C) -> (N, C) mean over T, H, W."""
    N = x_cl.shape[0]
    C = x_cl.shape[-1]
    S = 1
    for d in x_cl.shape[1:-1]:
        S *= int(d)
    x3 = x_cl.reshape(N, S, C).astype(jnp.float32)
    if S <= chunk_target:
        chunk, Sp = S, S
    else:
        chunk = chunk_target
        Sp = ((S + chunk - 1) // chunk) * chunk
        if Sp != S:  # zero-pad so the reduction never reads OOB garbage
            x3 = jnp.pad(x3, ((0, 0), (0, Sp - S), (0, 0)))
    out = pl.pallas_call(
        functools.partial(_mean_kernel, inv_n=1.0 / S),
        out_shape=jax.ShapeDtypeStruct((N, 1, C), jnp.float32),
        grid=(N, Sp // chunk),
        in_specs=[pl.BlockSpec((1, chunk, C), lambda b, j: (b, j, 0))],
        out_specs=pl.BlockSpec((1, 1, C), lambda b, j: (b, 0, 0)),
        compiler_params=pltpu.CompilerParams(
            dimension_semantics=("parallel", "arbitrary")),
    )(x3)
    return out.reshape(N, C)


# ---------------------------------------------------------------------------
# Pallas kernel 4: tiled broadcast gate multiply (self-gating apply)
# ---------------------------------------------------------------------------
def _gate_kernel(x_ref, g_ref, o_ref):
    o_ref[...] = x_ref[...] * g_ref[...]


def apply_gate(x_cl, gates, chunk_target=1024):
    shp = x_cl.shape
    N, C = shp[0], shp[-1]
    S = 1
    for d in shp[1:-1]:
        S *= int(d)
    x3 = x_cl.reshape(N, S, C)
    g3 = gates.reshape(N, 1, C).astype(x3.dtype)
    chunk = S if S <= chunk_target else chunk_target
    out = pl.pallas_call(
        _gate_kernel,
        out_shape=jax.ShapeDtypeStruct((N, S, C), x3.dtype),
        grid=(N, pl.cdiv(S, chunk)),
        in_specs=[pl.BlockSpec((1, chunk, C), lambda b, j: (b, j, 0)),
                  pl.BlockSpec((1, 1, C), lambda b, j: (b, 0, 0))],
        out_specs=pl.BlockSpec((1, chunk, C), lambda b, j: (b, j, 0)),
        compiler_params=pltpu.CompilerParams(
            dimension_semantics=("parallel", "parallel")),
    )(x3, g3)
    return out.reshape(shp)


# ---------------------------------------------------------------------------
# Pallas kernel 5: max over axis 1 (text branch th.max(x, dim=1)[0])
# ---------------------------------------------------------------------------
def _max_axis1_kernel(x_ref, o_ref):
    o_ref[...] = jnp.max(x_ref[...], axis=1, keepdims=True)


def max_over_axis1(x):
    B, L, D = x.shape
    out = pl.pallas_call(
        _max_axis1_kernel,
        out_shape=jax.ShapeDtypeStruct((B, 1, D), x.dtype),
        grid=(B,),
        in_specs=[pl.BlockSpec((1, L, D), lambda b: (b, 0, 0))],
        out_specs=pl.BlockSpec((1, 1, D), lambda b: (b, 0, 0)),
        compiler_params=pltpu.CompilerParams(dimension_semantics=("parallel",)),
    )(x)
    return out.reshape(B, D)


# ---------------------------------------------------------------------------
# Conv / pooling / gating building blocks (channels-last glue + Pallas compute)
# ---------------------------------------------------------------------------
def _bn_fold(bn):
    scale = bn["gamma"] * jax.lax.rsqrt(bn["var"] + BN_EPS)
    shift = bn["beta"] - bn["mean"] * scale
    return scale, shift


def conv3d_bn_act(x_cl, weight, bn, stride, padding, act="relu"):
    """Conv3d(bias=False)+BatchNorm3d(eval)+act on channels-last activations."""
    O, C, kd, kh, kw = weight.shape
    stride = tuple(int(s) for s in stride)
    padding = tuple(int(p) for p in padding)
    scale, shift = _bn_fold(bn)
    shp = x_cl.shape
    if (kd, kh, kw) == (1, 1, 1) and stride == (1, 1, 1) and padding == (0, 0, 0):
        M = 1
        for d in shp[:-1]:
            M *= int(d)
        out = matmul_scale_act(x_cl.reshape(M, C), weight.reshape(O, C).T,
                               scale, shift, act=act)
        return out.reshape(shp[:-1] + (O,))
    # TODO(synk): 1x3x3 / 3x1x1 taps could be accumulated via shifted views to
    #             avoid the im2col HBM expansion; im2col (channels-last, no
    #             transposes) is used here.
    patches = jax.lax.conv_general_dilated_patches(
        x_cl, (kd, kh, kw), stride, [(p, p) for p in padding],
        dimension_numbers=("NDHWC", "DHWIO", "NDHWC"))
    N, Do, Ho, Wo, CK = patches.shape
    out = matmul_scale_act(patches.reshape(N * Do * Ho * Wo, CK),
                           weight.reshape(O, CK).T, scale, shift, act=act)
    return out.reshape(N, Do, Ho, Wo, O)


def linear(x, p, act="none"):
    O = p["w"].shape[0]
    return matmul_scale_act(x, p["w"].T, jnp.ones((O,), jnp.float32), p["b"], act=act)


def fused_pointwise_convs(x_cl, branch_params):
    """Several 1x1x1 conv+BN+ReLU sharing one input -> one lane-dense matmul."""
    shp = x_cl.shape
    C = shp[-1]
    M = 1
    for d in shp[:-1]:
        M *= int(d)
    ws, scs, shs, sizes = [], [], [], []
    for bp in branch_params:
        w = bp["conv1"]["w"]
        O = w.shape[0]
        ws.append(w.reshape(O, C))
        s, b = _bn_fold(bp["bn1"])
        scs.append(s)
        shs.append(b)
        sizes.append(O)
    w_cat = jnp.concatenate(ws, axis=0).T                 # (C, sum O)
    out = matmul_scale_act(x_cl.reshape(M, C), w_cat,
                           jnp.concatenate(scs), jnp.concatenate(shs), act="relu")
    outs, off = [], 0
    for O in sizes:
        outs.append(out[:, off:off + O].reshape(shp[:-1] + (O,)))
        off += O
    return outs


def get_padding_shape(filter_shape, stride):
    def _pad_top_bottom(filter_dim, stride_val):
        pad_along = max(filter_dim - stride_val, 0)
        pad_top = pad_along // 2
        pad_bottom = pad_along - pad_top
        return (pad_top, pad_bottom)
    padding_shape = []
    for filter_dim, stride_val in zip(filter_shape, stride):
        pad_top, pad_bottom = _pad_top_bottom(filter_dim, stride_val)
        padding_shape.append(pad_top)
        padding_shape.append(pad_bottom)
    depth_top = padding_shape.pop(0)
    depth_bottom = padding_shape.pop(0)
    padding_shape.append(depth_top)
    padding_shape.append(depth_bottom)
    return tuple(padding_shape)


def _pool_out_size(L, k, s, ceil_mode):
    if ceil_mode:
        o = -(-(L - k) // s) + 1
        if (o - 1) * s >= L:
            o -= 1
    else:
        o = (L - k) // s + 1
    return o


def _pool_dim(x, axis, k, s, ceil_mode):
    """Windowed max along one axis (separable 3-D max pooling component)."""
    L = x.shape[axis]
    o = _pool_out_size(L, k, s, ceil_mode)
    extra = max(0, (o - 1) * s + k - L)
    if extra > 0:
        pads = [(0, 0)] * x.ndim
        pads[axis] = (0, extra)
        x = jnp.pad(x, pads, constant_values=NEG)
    lim = (o - 1) * s + 1
    slices = [jax.lax.slice_in_dim(x, j, j + lim, stride=s, axis=axis)
              for j in range(k)]
    return elementwise_max(slices)


def _maxpool3d_cl(x, kernel, stride, ceil_mode):
    for axis, k, s in zip((1, 2, 3), kernel, stride):
        if k == 1 and s == 1:
            continue
        x = _pool_dim(x, axis, k, s, ceil_mode)
    return x


def maxpool3d_tf_same(x, kernel, stride):
    """MaxPool3dTFPadding: ConstantPad3d(pad, 0) then MaxPool3d(ceil_mode=True)."""
    ps = get_padding_shape(kernel, stride)
    pad_w, pad_h, pad_d = (ps[0], ps[1]), (ps[2], ps[3]), (ps[4], ps[5])
    xp = jnp.pad(x, ((0, 0), pad_d, pad_h, pad_w, (0, 0)), constant_values=0.0)
    return _maxpool3d_cl(xp, kernel, stride, ceil_mode=True)


def maxpool3d_torch(x, kernel, stride, padding):
    """nn.MaxPool3d with implicit -inf padding, ceil_mode=False."""
    xp = jnp.pad(x, ((0, 0),
                     (padding[0], padding[0]),
                     (padding[1], padding[1]),
                     (padding[2], padding[2]),
                     (0, 0)), constant_values=NEG)
    return _maxpool3d_cl(xp, kernel, stride, ceil_mode=False)


def self_gating(p, x_cl):
    feats = spatial_mean(x_cl)                                  # (N, C)
    weights = linear(feats, p, act="sigmoid")                   # (N, C)
    return apply_gate(x_cl, weights)


def stconv_forward(p, x):
    c1 = p["conv1"]
    x = conv3d_bn_act(x, c1["w"], p["bn1"], c1["stride"], c1["pad"], act="relu")
    if "conv2" in p:
        c2 = p["conv2"]
        x = conv3d_bn_act(x, c2["w"], p["bn2"], c2["stride"], c2["pad"], act="relu")
    return x


def inception_forward(p, x):
    # conv_b0 / conv_b1_a / conv_b2_a share the same input -> one fused matmul
    b0, b1, b2 = fused_pointwise_convs(
        x, [p["conv_b0"], p["conv_b1_a"], p["conv_b2_a"]])
    b1 = stconv_forward(p["conv_b1_b"], b1)
    b2 = stconv_forward(p["conv_b2_b"], b2)
    b3 = maxpool3d_torch(x, (3, 3, 3), (1, 1, 1), (1, 1, 1))
    b3 = stconv_forward(p["conv_b3_b"], b3)
    b0 = self_gating(p["gating_b0"], b0)
    b1 = self_gating(p["gating_b1"], b1)
    b2 = self_gating(p["gating_b2"], b2)
    b3 = self_gating(p["gating_b3"], b3)
    return jnp.concatenate((b0, b1, b2, b3), axis=-1)   # lane-dense channel concat


# ---------------------------------------------------------------------------
# Deterministic parameter initialization (shapes per the PyTorch __init__)
# ---------------------------------------------------------------------------
class KeyGen:
    def __init__(self, seed):
        self._key = jax.random.PRNGKey(seed)

    def __call__(self):
        self._key, sub = jax.random.split(self._key)
        return sub


def init_conv_w(kg, cout, cin, k):
    fan_in = cin * k[0] * k[1] * k[2]
    return jax.random.normal(kg(), (cout, cin, k[0], k[1], k[2]),
                             jnp.float32) * (1.0 / float(fan_in) ** 0.5)


def init_bn(kg, c):
    return {
        "gamma": 1.0 + 0.05 * jax.random.normal(kg(), (c,), jnp.float32),
        "beta": 0.05 * jax.random.normal(kg(), (c,), jnp.float32),
        "mean": 0.05 * jax.random.normal(kg(), (c,), jnp.float32),
        "var": 1.0 + 0.1 * jax.random.uniform(kg(), (c,), jnp.float32),
    }


def init_linear(kg, cin, cout):
    return {
        "w": jax.random.normal(kg(), (cout, cin), jnp.float32) * (1.0 / float(cin) ** 0.5),
        "b": 0.01 * jax.random.normal(kg(), (cout,), jnp.float32),
    }


def init_stconv(kg, cin, cout, k, stride=1, padding=0, separable=False):
    p = {}
    if separable and k[0] != 1:
        sk, tk = (1, k[1], k[2]), (k[0], 1, 1)
        if isinstance(stride, (list, tuple)) and len(stride) == 3:
            ss, ts = (1, stride[1], stride[2]), (stride[0], 1, 1)
        else:
            ss, ts = (1, stride, stride), (stride, 1, 1)
        if isinstance(padding, (list, tuple)) and len(padding) == 3:
            sp, tp = (0, padding[1], padding[2]), (padding[0], 0, 0)
        else:
            sp, tp = (0, padding, padding), (padding, 0, 0)
        p["conv1"] = {"w": init_conv_w(kg, cout, cin, sk), "stride": ss, "pad": sp}
        p["bn1"] = init_bn(kg, cout)
        p["conv2"] = {"w": init_conv_w(kg, cout, cout, tk), "stride": ts, "pad": tp}
        p["bn2"] = init_bn(kg, cout)
    else:
        st = tuple(stride) if isinstance(stride, (list, tuple)) else (stride,) * 3
        pd = tuple(padding) if isinstance(padding, (list, tuple)) else (padding,) * 3
        p["conv1"] = {"w": init_conv_w(kg, cout, cin, tuple(k)), "stride": st, "pad": pd}
        p["bn1"] = init_bn(kg, cout)
    return p


def init_s3d(kg, num_classes=512, num_embeddings=66250,
             word_embedding_dim=300, text_hidden=2048):
    P = {}
    P["conv1"] = init_stconv(kg, 3, 64, [3, 7, 7], stride=2, padding=(1, 3, 3))
    P["conv_2b"] = init_stconv(kg, 64, 64, [1, 1, 1])
    P["conv_2c"] = init_stconv(kg, 64, 192, [3, 3, 3], padding=1, separable=True)
    P["gating"] = init_linear(kg, 192, 192)

    def incep(cin, a, b0, b1, c0, c1, d):
        blk = {
            "conv_b0": init_stconv(kg, cin, a, [1, 1, 1]),
            "conv_b1_a": init_stconv(kg, cin, b0, [1, 1, 1]),
            "conv_b1_b": init_stconv(kg, b0, b1, [3, 3, 3], padding=1, separable=True),
            "conv_b2_a": init_stconv(kg, cin, c0, [1, 1, 1]),
            "conv_b2_b": init_stconv(kg, c0, c1, [3, 3, 3], padding=1, separable=True),
            "conv_b3_b": init_stconv(kg, cin, d, [1, 1, 1]),
            "gating_b0": init_linear(kg, a, a),
            "gating_b1": init_linear(kg, b1, b1),
            "gating_b2": init_linear(kg, c1, c1),
            "gating_b3": init_linear(kg, d, d),
        }
        return blk, a + b1 + c1 + d

    P["mixed_3b"], dim = incep(192, 64, 96, 128, 16, 32, 32)
    P["mixed_3c"], dim = incep(dim, 128, 128, 192, 32, 96, 64)
    P["mixed_4b"], dim = incep(dim, 192, 96, 208, 16, 48, 64)
    P["mixed_4c"], dim = incep(dim, 160, 112, 224, 24, 64, 64)
    P["mixed_4d"], dim = incep(dim, 128, 128, 256, 24, 64, 64)
    P["mixed_4e"], dim = incep(dim, 112, 144, 288, 32, 64, 64)
    P["mixed_4f"], dim = incep(dim, 256, 160, 320, 32, 128, 128)
    P["mixed_5b"], dim = incep(dim, 256, 160, 320, 32, 128, 128)
    P["mixed_5c"], dim = incep(dim, 384, 192, 384, 48, 128, 128)
    P["fc"] = init_linear(kg, dim, num_classes)
    # Sentence_Embedding parameters
    P["text"] = {
        "word_embd": 0.02 * jax.random.normal(
            kg(), (num_embeddings, word_embedding_dim), jnp.float32),
        "fc1": init_linear(kg, word_embedding_dim, text_hidden),
        "fc2": init_linear(kg, text_hidden, num_classes),
    }
    return P


# ---------------------------------------------------------------------------
# Full S3D forward (mode='all')
# ---------------------------------------------------------------------------
def forward_video(P, x):
    net = jnp.transpose(x, (0, 2, 3, 4, 1))            # NCDHW -> NDHWC (once)
    net = stconv_forward(P["conv1"], net)
    net = maxpool3d_tf_same(net, (1, 3, 3), (1, 2, 2))
    net = stconv_forward(P["conv_2b"], net)
    net = stconv_forward(P["conv_2c"], net)
    net = self_gating(P["gating"], net)
    net = maxpool3d_tf_same(net, (1, 3, 3), (1, 2, 2))
    net = inception_forward(P["mixed_3b"], net)
    net = inception_forward(P["mixed_3c"], net)
    net = maxpool3d_tf_same(net, (3, 3, 3), (2, 2, 2))
    net = inception_forward(P["mixed_4b"], net)
    net = inception_forward(P["mixed_4c"], net)
    net = inception_forward(P["mixed_4d"], net)
    net = inception_forward(P["mixed_4e"], net)
    net = inception_forward(P["mixed_4f"], net)
    net = maxpool3d_tf_same(net, (2, 2, 2), (2, 2, 2))
    net = inception_forward(P["mixed_5b"], net)
    net = inception_forward(P["mixed_5c"], net)
    pooled = spatial_mean(net)                          # (N, C)
    return linear(pooled, P["fc"], act="none")


def forward_text(tp, ids):
    # TODO(synk): raw-text tokenization (dict.npy lookup / regex split) is file-based
    #             and omitted; the forward consumes token-id tensors directly.
    emb = tp["word_embd"][ids]                          # embedding gather (JAX glue)
    B, Wd, E = emb.shape
    h = linear(emb.reshape(B * Wd, E), tp["fc1"], act="relu").reshape(B, Wd, -1)
    h = max_over_axis1(h)                               # th.max(x, dim=1)[0]
    return linear(h, tp["fc2"], act="none")


def s3d_forward(P, video, text_ids):
    return forward_video(P, video), forward_text(P["text"], text_ids)


# ---------------------------------------------------------------------------
if __name__ == "__main__":
    NUM_CLASSES = 512
    NUM_EMBEDDINGS = 66250
    MAX_WORDS = 16

    kg = KeyGen(42)
    params = init_s3d(kg, num_classes=NUM_CLASSES, num_embeddings=NUM_EMBEDDINGS)

    k_video, k_text = jax.random.split(jax.random.PRNGKey(0))
    video = jax.random.normal(k_video, (2, 3, 8, 32, 32), jnp.float32)   # NCDHW
    text_ids = jax.random.randint(k_text, (2, MAX_WORDS), 0, NUM_EMBEDDINGS)

    video_embd, text_embd = s3d_forward(params, video, text_ids)
    jax.block_until_ready((video_embd, text_embd))

    assert video_embd.shape == (2, NUM_CLASSES)
    assert text_embd.shape == (2, NUM_CLASSES)
    assert bool(jnp.all(jnp.isfinite(video_embd))) and bool(jnp.all(jnp.isfinite(text_embd)))
    print("KERNEL_OK")
</pallas_src>

<mosaic_0001>
module attributes {stable_mosaic.version = 11 : i64} {
  func.func @_matmul_scale_act_kernel(%arg0: i32, %arg1: memref<512x441xbf16, #tpu.memory_space<vmem>>, %arg2: memref<441x64xbf16, #tpu.memory_space<vmem>>, %arg3: memref<1x64xf32, #tpu.memory_space<vmem>>, %arg4: memref<1x64xf32, #tpu.memory_space<vmem>>, %arg5: memref<512x64xf32, #tpu.memory_space<vmem>>) attributes {dimension_semantics = [#tpu.dimension_semantics<parallel>], iteration_bounds = array<i64: 4>, scalar_prefetch = 0 : i64, scratch_operands = 0 : i64, tpu.core_type = #tpu.core_type<tc>, window_params = [{transform_indices = @transform_0, window_bounds = array<i64: 512, 441>}, {pipeline_mode = #tpu.pipeline_mode<synchronous>, transform_indices = @transform_1, window_bounds = array<i64: 441, 64>}, {pipeline_mode = #tpu.pipeline_mode<synchronous>, transform_indices = @transform_2, window_bounds = array<i64: 1, 64>}, {pipeline_mode = #tpu.pipeline_mode<synchronous>, transform_indices = @transform_3, window_bounds = array<i64: 1, 64>}, {transform_indices = @transform_4, window_bounds = array<i64: 512, 64>}]} {
    %c0 = arith.constant 0 : index
    %c0_0 = arith.constant 0 : index
    %0 = vector.load %arg1[%c0, %c0_0] : memref<512x441xbf16, #tpu.memory_space<vmem>>, vector<512x441xbf16>
    %c0_1 = arith.constant 0 : index
    %c0_2 = arith.constant 0 : index
    %1 = vector.load %arg2[%c0_1, %c0_2] : memref<441x64xbf16, #tpu.memory_space<vmem>>, vector<441x64xbf16>
    %cst = arith.constant dense<0.000000e+00> : vector<512x64xf32>
    %2 = tpu.matmul %0, %1, %cst {dimension_numbers = #tpu.dot_dimension_numbers<[1], [0], [0], [1], [0, 0, 1, 1], [], []>} : vector<512x441xbf16>, vector<441x64xbf16>, vector<512x64xf32> -> vector<512x64xf32>
    %c0_3 = arith.constant 0 : index
    %c0_4 = arith.constant 0 : index
    %3 = vector.load %arg3[%c0_3, %c0_4] : memref<1x64xf32, #tpu.memory_space<vmem>>, vector<1x64xf32>
    %4 = vector.broadcast %3 : vector<1x64xf32> to vector<512x64xf32>
    %5 = arith.mulf %2, %4 : vector<512x64xf32>
    %c0_5 = arith.constant 0 : index
    %c0_6 = arith.constant 0 : index
    %6 = vector.load %arg4[%c0_5, %c0_6] : memref<1x64xf32, #tpu.memory_space<vmem>>, vector<1x64xf32>
    %7 = vector.broadcast %6 : vector<1x64xf32> to vector<512x64xf32>
    %8 = arith.addf %5, %7 : vector<512x64xf32>
    %cst_7 = arith.constant 0.000000e+00 : f32
    %9 = vector.broadcast %cst_7 : f32 to vector<512x64xf32>
    %10 = arith.maximumf %8, %9 : vector<512x64xf32>
    %c0_8 = arith.constant 0 : index
    %c0_9 = arith.constant 0 : index
    %11 = vector.load %arg5[%c0_8, %c0_9] : memref<512x64xf32, #tpu.memory_space<vmem>>, vector<512x64xf32>
    tpu.vector_store %arg5[%c0_8, %c0_9], %10 {strides = array<i32>} : memref<512x64xf32, #tpu.memory_space<vmem>>, vector<512x64xf32>,
    return
  }
  func.func @transform_0(%arg0: i32) -> (i32, i32) {
    %c0_i32 = arith.constant 0 : i32
    %c0_i32_0 = arith.constant 0 : i32
    return %arg0, %c0_i32 : i32, i32
  }
  func.func @transform_1(%arg0: i32) -> (i32, i32) {
    %c0_i32 = arith.constant 0 : i32
    %c0_i32_0 = arith.constant 0 : i32
    %c0_i32_1 = arith.constant 0 : i32
    return %c0_i32, %c0_i32_0 : i32, i32
  }
  func.func @transform_2(%arg0: i32) -> (i32, i32) {
    %c0_i32 = arith.constant 0 : i32
    %c0_i32_0 = arith.constant 0 : i32
    %c0_i32_1 = arith.constant 0 : i32
    return %c0_i32, %c0_i32_0 : i32, i32
  }
  func.func @transform_3(%arg0: i32) -> (i32, i32) {
    %c0_i32 = arith.constant 0 : i32
    %c0_i32_0 = arith.constant 0 : i32
    %c0_i32_1 = arith.constant 0 : i32
    return %c0_i32, %c0_i32_0 : i32, i32
  }
  func.func @transform_4(%arg0: i32) -> (i32, i32) {
    %c0_i32 = arith.constant 0 : i32
    %c0_i32_0 = arith.constant 0 : i32
    return %arg0, %c0_i32 : i32, i32
  }
}

</mosaic_0001>

<llo_original>
// kernel: tpu_custom_call.1
$region0: #{tpu_custom_call.1}
  #allocation0 [shape = 'u32[]', space=smem, size = 0x4, offset = 0x4, fixed_abs, tag = 'smem constant byte address 0x4 - core index']
  #allocation1 [shape = 'u32[144,128]{1,0:T(1,128)}', space=vmem, size = 0x12000, scoped, tag = 'internal scratch']
  %s0 = inlined_call_operand.vmem [shape: bf16[2048,441], index: 0, kind: input, shape index: {}]
  %s1 = inlined_call_operand.vmem [shape: bf16[441,64], index: 1, kind: input, shape index: {}]
  %s2 = inlined_call_operand.vmem [shape: f32[1,64], index: 2, kind: input, shape index: {}]
  %s3 = inlined_call_operand.vmem [shape: f32[1,64], index: 3, kind: input, shape index: {}]
  %s4 = inlined_call_operand.vmem [shape: f32[2048,64], index: 4, kind: output, shape index: {}]
  %s5 = sld [smem:[#allocation0]]
  $region49: #{tpu_custom_call.1} parent=0
    _
  %s7 = ssub.s32 1, %s5
  %s8 = scalar_select 0, %s7, %s5
  loop: start=0, step=1, limit=6
  $region2: #{tpu_custom_call.1} parent=0 // loop_pre_header
    _
  $region3: #{tpu_custom_call.1} parent=0 // loop_header
    %s10 = sphi 0, %s14
    %p11 = scmp.ge.s32.totalorder %s10, 6
    %s20 = sphi 0, %s22
    %s23 = sphi 0, %s20
    %s24 = sphi 0, %s23
    %s40 = sphi 0, %s24
    %s44 = sphi 0, %s44
    %s46 = sphi 0, %s44
    %s47 = sphi 0, %s46
    %s61 = sphi 0, %s47
    %s65 = sphi 0, %s65
    %s67 = sphi 0, %s65
    %s68 = sphi 0, %s67
    %s82 = sphi 0, %s68
    %s86 = sphi 0, %s86
    %s88 = sphi 0, %s86
    %s89 = sphi 0, %s88
    %s103 = sphi 0, %s89
    %s109 = sphi 0, %s111
    %s112 = sphi 0, %s109
    %s113 = sphi 0, %s112
    %s129 = sphi 0, %s113
  $region4: #{tpu_custom_call.1} parent=0 // loop_header_branch
    %13 = sbr.rel (%p11) target = $region8
  $region5: #{tpu_custom_call.1} parent=0 // loop_body
    %s15 = ssub.s32 %s10, 1
    %s16 = ssub.s32 %s10, 2
    %s17 = sadd.s32 %s10, 1
    %s18 = ssub.s32 %s10, %s17
    %p19 = scmp.eq.s32.totalorder %s18, 0
    %s21 = sadd.s32 %s20, 1
    %s22 = scalar_select %p19, %s20, %s21
    %p25 = pneg %p19
    %p26 = scmp.eq.s32.totalorder %s10, 3
    %p27 = por %p25, %p26
    %p28 = scmp.ne.s32.totalorder %s20, %s23
    %p29 = scmp.eq.s32.totalorder %s10, 0
    %p30 = por %p28, %p29
    %p31 = scmp.ne.s32.totalorder %s20, %s23
    %p32 = scmp.eq.s32.totalorder %s15, 3
    %p33 = por %p31, %p32
    %p34 = scmp.ne.s32.totalorder %s23, %s24
    %p35 = scmp.eq.s32.totalorder %s15, 0
    %p36 = por %p34, %p35
    %p37 = scmp.ne.s32.totalorder %s23, %s24
    %p38 = scmp.eq.s32.totalorder %s16, 3
    %p39 = por %p37, %p38
    %p41 = scmp.ne.s32.totalorder %s24, %s40
    %p42 = scmp.eq.s32.totalorder %s16, 0
    %p43 = por %p41, %p42
    %s45 = sadd.s32 %s44, 1
    %p48 = scmp.eq.s32.totalorder %s10, 3
    %p49 = scmp.ne.s32.totalorder %s44, %s46
    %p50 = scmp.eq.s32.totalorder %s10, 0
    %p51 = por %p49, %p50
    %p52 = scmp.ne.s32.totalorder %s44, %s46
    %p53 = scmp.eq.s32.totalorder %s15, 3
    %p54 = por %p52, %p53
    %p55 = scmp.ne.s32.totalorder %s46, %s47
    %p56 = scmp.eq.s32.totalorder %s15, 0
    %p57 = por %p55, %p56
    %p58 = scmp.ne.s32.totalorder %s46, %s47
    %p59 = scmp.eq.s32.totalorder %s16, 3
    %p60 = por %p58, %p59
    %p62 = scmp.ne.s32.totalorder %s47, %s61
    %p63 = scmp.eq.s32.totalorder %s16, 0
    %p64 = por %p62, %p63
    %s66 = sadd.s32 %s65, 1
    %p69 = scmp.eq.s32.totalorder %s10, 3
    %p70 = scmp.ne.s32.totalorder %s65, %s67
    %p71 = scmp.eq.s32.totalorder %s10, 0
    %p72 = por %p70, %p71
    %p73 = scmp.ne.s32.totalorder %s65, %s67
    %p74 = scmp.eq.s32.totalorder %s15, 3
    %p75 = por %p73, %p74
    %p76 = scmp.ne.s32.totalorder %s67, %s68
    %p77 = scmp.eq.s32.totalorder %s15, 0
    %p78 = por %p76, %p77
    %p79 = scmp.ne.s32.totalorder %s67, %s68
    %p80 = scmp.eq.s32.totalorder %s16, 3
    %p81 = por %p79, %p80
    %p83 = scmp.ne.s32.totalorder %s68, %s82
    %p84 = scmp.eq.s32.totalorder %s16, 0
    %p85 = por %p83, %p84
    %s87 = sadd.s32 %s86, 1
    %p90 = scmp.eq.s32.totalorder %s10, 3
    %p91 = scmp.ne.s32.totalorder %s86, %s88
    %p92 = scmp.eq.s32.totalorder %s10, 0
    %p93 = por %p91, %p92
    %p94 = scmp.ne.s32.totalorder %s86, %s88
    %p95 = scmp.eq.s32.totalorder %s15, 3
    %p96 = por %p94, %p95
    %p97 = scmp.ne.s32.totalorder %s88, %s89
    %p98 = scmp.eq.s32.totalorder %s15, 0
    %p99 = por %p97, %p98
    %p100 = scmp.ne.s32.totalorder %s88, %s89
    %p101 = scmp.eq.s32.totalorder %s16, 3
    %p102 = por %p100, %p101
    %p104 = scmp.ne.s32.totalorder %s89, %s103
    %p105 = scmp.eq.s32.totalorder %s16, 0
    %p106 = por %p104, %p105
    %s107 = ssub.s32 %s10, %s17
    %p108 = scmp.eq.s32.totalorder %s107, 0
    %s110 = sadd.s32 %s109, 1
    %s111 = scalar_select %p108, %s109, %s110
    %p114 = pneg %p108
    %p115 = scmp.eq.s32.totalorder %s10, 3
    %p116 = por %p114, %p115
    %p117 = scmp.ne.s32.totalorder %s109, %s112
    %p118 = scmp.eq.s32.totalorder %s10, 0
    %p119 = por %p117, %p118
    %p120 = scmp.ne.s32.totalorder %s109, %s112
    %p121 = scmp.eq.s32.totalorder %s15, 3
    %p122 = por %p120, %p121
    %p123 = scmp.ne.s32.totalorder %s112, %s113
    %p124 = scmp.eq.s32.totalorder %s15, 0
    %p125 = por %p123, %p124
    %p126 = scmp.ne.s32.totalorder %s112, %s113
    %p127 = scmp.eq.s32.totalorder %s16, 3
    %p128 = por %p126, %p127
    %p130 = scmp.ne.s32.totalorder %s113, %s129
    %p131 = scmp.eq.s32.totalorder %s16, 0
    %p132 = por %p130, %p131
    %p133 = scmp.le.s32.totalorder 1, %s10
    %p134 = scmp.lt.s32.totalorder %s10, 5
    %p135 = pnand %p133, %p134
    %p136 = pneg %p135
    // Predicated region
    $region9: #{tpu_custom_call.1} parent=5 // pred_check
      _
    $region10: #{tpu_custom_call.1} parent=5 // pred_check_branch
      %138 = sbr.rel (%p135) target = $region12
    $region11: #{tpu_custom_call.1} parent=5 // pred_region
      %s139 = ssub.s32 %s10, 1
      // Predicated region
      $region13: #{tpu_custom_call.1} parent=11 // pred_check
        %p140 = pneg %p57
      $region14: #{tpu_custom_call.1} parent=11 // pred_check_branch
        %142 = sbr.rel (%p140) target = $region16
      $region15: #{tpu_custom_call.1} parent=11 // pred_region
        _
      $region16: #{tpu_custom_call.1} parent=11 // pred_fallthru
        _
      // Predicated region
      $region17: #{tpu_custom_call.1} parent=11 // pred_check
        %p143 = pneg %p78
      $region18: #{tpu_custom_call.1} parent=11 // pred_check_branch
        %145 = sbr.rel (%p143) target = $region20
      $region19: #{tpu_custom_call.1} parent=11 // pred_region
        _
      $region20: #{tpu_custom_call.1} parent=11 // pred_fallthru
        _
      // Predicated region
      $region21: #{tpu_custom_call.1} parent=11 // pred_check
        %p146 = pneg %p99
      $region22: #{tpu_custom_call.1} parent=11 // pred_check_branch
        %148 = sbr.rel (%p146) target = $region24
      $region23: #{tpu_custom_call.1} parent=11 // pred_region
        _
      $region24: #{tpu_custom_call.1} parent=11 // pred_fallthru
        _
    $region12: #{tpu_custom_call.1} parent=5 // pred_fallthru
      _
    %p149 = scmp.lt.s32.totalorder %s10, 4
    // Predicated region
    $region25: #{tpu_custom_call.1} parent=5 // pred_check
      %p150 = pneg %p149
    $region26: #{tpu_custom_call.1} parent=5 // pred_check_branch
      %152 = sbr.rel (%p150) target = $region28
    $region27: #{tpu_custom_call.1} parent=5 // pred_region
      // Predicated region
      $region29: #{tpu_custom_call.1} parent=27 // pred_check
        %p153 = pneg %p30
      $region30: #{tpu_custom_call.1} parent=27 // pred_check_branch
        %155 = sbr.rel (%p153) target = $region32
      $region31: #{tpu_custom_call.1} parent=27 // pred_region
        %s156 = smul.u32 64, %s10
        %p157 = scmp.lt.s32.totalorder %s156, 255
        %s158 = scalar_select %p157, %s156, 255
        %s159 = smul.addr %s158, 4
        %s160 = smul.addr %s159, 4
        %s161 = scalar_lea.vmem %s0, %s160
        %s162 = smul.u32 64, %s10
      $region32: #{tpu_custom_call.1} parent=27 // pred_fallthru
        _
    $region28: #{tpu_custom_call.1} parent=5 // pred_fallthru
      _
    %p163 = scmp.le.s32.totalorder 1, %s10
    %p164 = scmp.lt.s32.totalorder %s10, 5
    %p165 = pnand %p163, %p164
    %p166 = pneg %p165
    // Predicated region
    $region33: #{tpu_custom_call.1} parent=5 // pred_check
      _
    $region34: #{tpu_custom_call.1} parent=5 // pred_check_branch
      %168 = sbr.rel (%p165) target = $region36
    $region35: #{tpu_custom_call.1} parent=5 // pred_region
      %s169 = ssub.s32 %s10, 1
      %s170 = smul.u32 64, %s15
      %p171 = scmp.lt.s32.totalorder %s170, 255
      %s172 = scalar_select %p171, %s170, 255
      %s173 = smul.addr %s172, 4
      %s174 = smul.addr %s173, 4
      %s175 = scalar_lea.vmem %s0, %s174
      %p176 = pneg %p36
      %p177 = pneg %p33
      %p178 = pneg %p57
      %p179 = pneg %p54
      %p180 = pneg %p78
      %p181 = pneg %p75
      %p182 = pneg %p99
      %p183 = pneg %p96
      %p184 = pneg %p125
      %p185 = pneg %p122
      %s186 = smul.u32 64, %s15
      %p187 = scmp.lt.s32.totalorder %s186, 255
      %s188 = scalar_select %p187, %s186, 255
      %s189 = smul.addr %s188, 8
      %s190 = scalar_lea.vmem %s4, %s189
      %s191 = smul.u32 64, %s15
      %p192 = scmp.lt.s32.totalorder %s191, 255
      %s193 = scalar_select %p192, %s191, 255
      %s194 = smul.addr %s193, 4
      %s195 = smul.addr %s194, 4
      %s196 = scalar_lea.vmem %s0, %s195
      %s197 = smul.u32 64, %s15
      %s198 = smul.u32 64, %s15
      %p199 = scmp.lt.s32.totalorder %s198, 255
      %s200 = scalar_select %p199, %s198, 255
      %s201 = smul.addr %s200, 8
      %s202 = scalar_lea.vmem %s4, %s201
      %s203 = smul.u32 64, %s15
      %v205 = vld [vmem:[%s196] sm:$0xff]
      %v206 = vld [vmem:[%s196 + $0x8] sm:$0xff]
      %v207 = vld [vmem:[%s196 + $0x10] sm:$0xff]
      %v208 = vld [vmem:[%s196 + $0x18] sm:$0xff]
      %v209 = vld [vmem:[%s196 + $0x20] sm:$0xff]
      %v210 = vld [vmem:[%s196 + $0x28] sm:$0xff]
      %v211 = vld [vmem:[%s196 + $0x30] sm:$0xff]
      %v212 = vld [vmem:[%s196 + $0x38] sm:$0xff]
      %v213 = vld [vmem:[%s196 + $0x40] sm:$0xff]
      %v214 = vld [vmem:[%s196 + $0x48] sm:$0xff]
      %v215 = vld [vmem:[%s196 + $0x50] sm:$0xff]
      %v216 = vld [vmem:[%s196 + $0x58] sm:$0xff]
      %v217 = vld [vmem:[%s196 + $0x60] sm:$0xff]
      %v218 = vld [vmem:[%s196 + $0x68] sm:$0xff]
      %v219 = vld [vmem:[%s196 + $0x70] sm:$0xff]
      %v220 = vld [vmem:[%s196 + $0x78] sm:$0xff]
      %v221 = vld [vmem:[%s196 + $0x80] sm:$0xff]
      %v222 = vld [vmem:[%s196 + $0x88] sm:$0xff]
      %v223 = vld [vmem:[%s196 + $0x90] sm:$0xff]
      %v224 = vld [vmem:[%s196 + $0x98] sm:$0xff]
      %v225 = vld [vmem:[%s196 + $0xa0] sm:$0xff]
      %v226 = vld [vmem:[%s196 + $0xa8] sm:$0xff]
      %v227 = vld [vmem:[%s196 + $0xb0] sm:$0xff]
      %v228 = vld [vmem:[%s196 + $0xb8] sm:$0xff]
      %v229 = vld [vmem:[%s196 + $0xc0] sm:$0xff]
      %v230 = vld [vmem:[%s196 + $0xc8] sm:$0xff]
      %v231 = vld [vmem:[%s196 + $0xd0] sm:$0xff]
      %v232 = vld [vmem:[%s196 + $0xd8] sm:$0xff]
      %v233 = vld [vmem:[%s196 + $0xe0] sm:$0xff]
      %v234 = vld [vmem:[%s196 + $0xe8] sm:$0xff]
      %v235 = vld [vmem:[%s196 + $0xf0] sm:$0xff]
      %v236 = vld [vmem:[%s196 + $0xf8] sm:$0xff]
      %v237 = vld [vmem:[%s196 + $0x100] sm:$0xff]
      %v238 = vld [vmem:[%s196 + $0x108] sm:$0xff]
      %v239 = vld [vmem:[%s196 + $0x110] sm:$0xff]
      %v240 = vld [vmem:[%s196 + $0x118] sm:$0xff]
      %v241 = vld [vmem:[%s196 + $0x120] sm:$0xff]
      %v242 = vld [vmem:[%s196 + $0x128] sm:$0xff]
      %v243 = vld [vmem:[%s196 + $0x130] sm:$0xff]
      %v244 = vld [vmem:[%s196 + $0x138] sm:$0xff]
      %v245 = vld [vmem:[%s196 + $0x140] sm:$0xff]
      %v246 = vld [vmem:[%s196 + $0x148] sm:$0xff]
      %v247 = vld [vmem:[%s196 + $0x150] sm:$0xff]
      %v248 = vld [vmem:[%s196 + $0x158] sm:$0xff]
      %v249 = vld [vmem:[%s196 + $0x160] sm:$0xff]
      %v250 = vld [vmem:[%s196 + $0x168] sm:$0xff]
      %v251 = vld [vmem:[%s196 + $0x170] sm:$0xff]
      %v252 = vld [vmem:[%s196 + $0x178] sm:$0xff]
      %v253 = vld [vmem:[%s196 + $0x180] sm:$0xff]
      %v254 = vld [vmem:[%s196 + $0x188] sm:$0xff]
      %v255 = vld [vmem:[%s196 + $0x190] sm:$0xff]
      %v256 = vld [vmem:[%s196 + $0x198] sm:$0xff]
      %v257 = vld [vmem:[%s196 + $0x1a0] sm:$0xff]
      %v258 = vld [vmem:[%s196 + $0x1a8] sm:$0xff]
      %v259 = vld [vmem:[%s196 + $0x1b0] sm:$0xff]
      %v260 = vld [vmem:[%s196 + $0x1b8] sm:$0xff]
      %v261 = vld [vmem:[%s196 + $0x1c0] sm:$0xff]
      %v262 = vld [vmem:[%s196 + $0x1c8] sm:$0xff]
      %v263 = vld [vmem:[%s196 + $0x1d0] sm:$0xff]
      %v264 = vld [vmem:[%s196 + $0x1d8] sm:$0xff]
      %v265 = vld [vmem:[%s196 + $0x1e0] sm:$0xff]
      %v266 = vld [vmem:[%s196 + $0x1e8] sm:$0xff]
      %v267 = vld [vmem:[%s196 + $0x1f0] sm:$0xff]
      %v268 = vld [vmem:[%s196 + $0x1f8] sm:$0xff]
      %v269 = vld [vmem:[%s196 + $0x200] sm:$0xff]
      %v270 = vld [vmem:[%s196 + $0x208] sm:$0xff]
      %v271 = vld [vmem:[%s196 + $0x210] sm:$0xff]
      %v272 = vld [vmem:[%s196 + $0x218] sm:$0xff]
      %v273 = vld [vmem:[%s196 + $0x220] sm:$0xff]
      %v274 = vld [vmem:[%s196 + $0x228] sm:$0xff]
      %v275 = vld [vmem:[%s196 + $0x230] sm:$0xff]
      %v276 = vld [vmem:[%s196 + $0x238] sm:$0xff]
      %v277 = vld [vmem:[%s196 + $0x240] sm:$0xff]
      %v278 = vld [vmem:[%s196 + $0x248] sm:$0xff]
      %v279 = vld [vmem:[%s196 + $0x250] sm:$0xff]
      %v280 = vld [vmem:[%s196 + $0x258] sm:$0xff]
      %v281 = vld [vmem:[%s196 + $0x260] sm:$0xff]
      %v282 = vld [vmem:[%s196 + $0x268] sm:$0xff]
      %v283 = vld [vmem:[%s196 + $0x270] sm:$0xff]
      %v284 = vld [vmem:[%s196 + $0x278] sm:$0xff]
      %v285 = vld [vmem:[%s196 + $0x280] sm:$0xff]
      %v286 = vld [vmem:[%s196 + $0x288] sm:$0xff]
      %v287 = vld [vmem:[%s196 + $0x290] sm:$0xff]
      %v288 = vld [vmem:[%s196 + $0x298] sm:$0xff]
      %v289 = vld [vmem:[%s196 + $0x2a0] sm:$0xff]
      %v290 = vld [vmem:[%s196 + $0x2a8] sm:$0xff]
      %v291 = vld [vmem:[%s196 + $0x2b0] sm:$0xff]
      %v292 = vld [vmem:[%s196 + $0x2b8] sm:$0xff]
      %v293 = vld [vmem:[%s196 + $0x2c0] sm:$0xff]
      %v294 = vld [vmem:[%s196 + $0x2c8] sm:$0xff]
      %v295 = vld [vmem:[%s196 + $0x2d0] sm:$0xff]
      %v296 = vld [vmem:[%s196 + $0x2d8] sm:$0xff]
      %v297 = vld [vmem:[%s196 + $0x2e0] sm:$0xff]
      %v298 = vld [vmem:[%s196 + $0x2e8] sm:$0xff]
      %v299 = vld [vmem:[%s196 + $0x2f0] sm:$0xff]
      %v300 = vld [vmem:[%s196 + $0x2f8] sm:$0xff]
      %v301 = vld [vmem:[%s196 + $0x300] sm:$0xff]
      %v302 = vld [vmem:[%s196 + $0x308] sm:$0xff]
      %v303 = vld [vmem:[%s196 + $0x310] sm:$0xff]
      %v304 = vld [vmem:[%s196 + $0x318] sm:$0xff]
      %v305 = vld [vmem:[%s196 + $0x320] sm:$0xff]
      %v306 = vld [vmem:[%s196 + $0x328] sm:$0xff]
      %v307 = vld [vmem:[%s196 + $0x330] sm:$0xff]
      %v308 = vld [vmem:[%s196 + $0x338] sm:$0xff]
      %v309 = vld [vmem:[%s196 + $0x340] sm:$0xff]
      %v310 = vld [vmem:[%s196 + $0x348] sm:$0xff]
      %v311 = vld [vmem:[%s196 + $0x350] sm:$0xff]
      %v312 = vld [vmem:[%s196 + $0x358] sm:$0xff]
      %v313 = vld [vmem:[%s196 + $0x360] sm:$0xff]
      %v314 = vld [vmem:[%s196 + $0x368] sm:$0xff]
      %v315 = vld [vmem:[%s196 + $0x370] sm:$0xff]
      %v316 = vld [vmem:[%s196 + $0x378] sm:$0xff]
      %v317 = vld [vmem:[%s196 + $0x380] sm:$0xff]
      %v318 = vld [vmem:[%s196 + $0x388] sm:$0xff]
      %v319 = vld [vmem:[%s196 + $0x390] sm:$0xff]
      %v320 = vld [vmem:[%s196 + $0x398] sm:$0xff]
      %v321 = vld [vmem:[%s196 + $0x3a0] sm:$0xff]
      %v322 = vld [vmem:[%s196 + $0x3a8] sm:$0xff]
      %v323 = vld [vmem:[%s196 + $0x3b0] sm:$0xff]
      %v324 = vld [vmem:[%s196 + $0x3b8] sm:$0xff]
      %v325 = vld [vmem:[%s196 + $0x3c0] sm:$0xff]
      %v326 = vld [vmem:[%s196 + $0x3c8] sm:$0xff]
      %v327 = vld [vmem:[%s196 + $0x3d0] sm:$0xff]
      %v328 = vld [vmem:[%s196 + $0x3d8] sm:$0xff]
      %v329 = vld [vmem:[%s196 + $0x3e0] sm:$0xff]
      %v330 = vld [vmem:[%s196 + $0x3e8] sm:$0xff]
      %v331 = vld [vmem:[%s196 + $0x3f0] sm:$0xff]
      %v332 = vld [vmem:[%s196 + $0x3f8] sm:$0xff]
      %v333 = vld [vmem:[%s1] sm:$0xf]
      %v334 = vld [vmem:[%s1 + $0x4] sm:$0xf]
      %v335 = vld [vmem:[%s1 + $0x8] sm:$0xf]
      %v336 = vld [vmem:[%s1 + $0xc] sm:$0xf]
      %v337 = vld [vmem:[%s1 + $0x10] sm:$0xf]
      %v338 = vld [vmem:[%s1 + $0x14] sm:$0xf]
      %v339 = vld [vmem:[%s1 + $0x18] sm:$0xf]
      %v340 = vld [vmem:[%s1 + $0x1c] sm:$0xf]
      %v341 = vld [vmem:[%s1 + $0x20] sm:$0xf]
      %v342 = vld [vmem:[%s1 + $0x24] sm:$0xf]
      %v343 = vld [vmem:[%s1 + $0x28] sm:$0xf]
      %v344 = vld [vmem:[%s1 + $0x2c] sm:$0xf]
      %v345 = vld [vmem:[%s1 + $0x30] sm:$0xf]
      %v346 = vld [vmem:[%s1 + $0x34] sm:$0xf]
      %v347 = vld [vmem:[%s1 + $0x38] sm:$0xf]
      %v348 = vld [vmem:[%s1 + $0x3c] sm:$0xf]
      %v349 = vld [vmem:[%s1 + $0x40] sm:$0xf]
      %v350 = vld [vmem:[%s1 + $0x44] sm:$0xf]
      %v351 = vld [vmem:[%s1 + $0x48] sm:$0xf]
      %v352 = vld [vmem:[%s1 + $0x4c] sm:$0xf]
      %v353 = vld [vmem:[%s1 + $0x50] sm:$0xf]
      %v354 = vld [vmem:[%s1 + $0x54] sm:$0xf]
      %v355 = vld [vmem:[%s1 + $0x58] sm:$0xf]
      %v356 = vld [vmem:[%s1 + $0x5c] sm:$0xf]
      %v357 = vld [vmem:[%s1 + $0x60] sm:$0xf]
      %v358 = vld [vmem:[%s1 + $0x64] sm:$0xf]
      %v359 = vld [vmem:[%s1 + $0x68] sm:$0xf]
      %v360 = vld [vmem:[%s1 + $0x6c] sm:$0xf]
      %v361 = vld [vmem:[%s1 + $0x70] sm:$0xf]
      %v362 = vld [vmem:[%s1 + $0x74] sm:$0xf]
      %v363 = vld [vmem:[%s1 + $0x78] sm:$0xf]
      %v364 = vld [vmem:[%s1 + $0x7c] sm:$0xf]
      %v365 = vld [vmem:[%s1 + $0x80] sm:$0xf]
      %v366 = vld [vmem:[%s1 + $0x84] sm:$0xf]
      %v367 = vld [vmem:[%s1 + $0x88] sm:$0xf]
      %v368 = vld [vmem:[%s1 + $0x8c] sm:$0xf]
      %v369 = vld [vmem:[%s1 + $0x90] sm:$0xf]
      %v370 = vld [vmem:[%s1 + $0x94] sm:$0xf]
      %v371 = vld [vmem:[%s1 + $0x98] sm:$0xf]
      %v372 = vld [vmem:[%s1 + $0x9c] sm:$0xf]
      %v373 = vld [vmem:[%s1 + $0xa0] sm:$0xf]
      %v374 = vld [vmem:[%s1 + $0xa4] sm:$0xf]
      %v375 = vld [vmem:[%s1 + $0xa8] sm:$0xf]
      %v376 = vld [vmem:[%s1 + $0xac] sm:$0xf]
      %v377 = vld [vmem:[%s1 + $0xb0] sm:$0xf]
      %v378 = vld [vmem:[%s1 + $0xb4] sm:$0xf]
      %v379 = vld [vmem:[%s1 + $0xb8] sm:$0xf]
      %v380 = vld [vmem:[%s1 + $0xbc] sm:$0xf]
      %v381 = vld [vmem:[%s1 + $0xc0] sm:$0xf]
      %v382 = vld [vmem:[%s1 + $0xc4] sm:$0xf]
      %v383 = vld [vmem:[%s1 + $0xc8] sm:$0xf]
      %v384 = vld [vmem:[%s1 + $0xcc] sm:$0xf]
      %v385 = vld [vmem:[%s1 + $0xd0] sm:$0xf]
      %v386 = vld [vmem:[%s1 + $0xd4] sm:$0xf]
      %v387 = vld [vmem:[%s1 + $0xd8] sm:$0xf]
      %v388 = vld [vmem:[%s1 + $0xdc] sm:$0x1]
      %v517 = vunpack.c.l.b16 %v205
      %v518 = vunpack.c.h.b16 %v205
      %v519 = vunpack.c.l.b16 %v206
      %v520 = vunpack.c.h.b16 %v206
      %v521 = vunpack.c.l.b16 %v207
      %v522 = vunpack.c.h.b16 %v207
      %v523 = vunpack.c.l.b16 %v208
      %v524 = vunpack.c.h.b16 %v208
      %v525 = vunpack.c.l.b16 %v209
      %v526 = vunpack.c.h.b16 %v209
      %v527 = vunpack.c.l.b16 %v210
      %v528 = vunpack.c.h.b16 %v210
      %v529 = vunpack.c.l.b16 %v211
      %v530 = vunpack.c.h.b16 %v211
      %v531 = vunpack.c.l.b16 %v212
      %v532 = vunpack.c.h.b16 %v212
      %v533 = vunpack.c.l.b16 %v213
      %v534 = vunpack.c.h.b16 %v213
      %v535 = vunpack.c.l.b16 %v214
      %v536 = vunpack.c.h.b16 %v214
      %v537 = vunpack.c.l.b16 %v215
      %v538 = vunpack.c.h.b16 %v215
      %v539 = vunpack.c.l.b16 %v216
      %v540 = vunpack.c.h.b16 %v216
      %v541 = vunpack.c.l.b16 %v217
      %v542 = vunpack.c.h.b16 %v217
      %v543 = vunpack.c.l.b16 %v218
      %v544 = vunpack.c.h.b16 %v218
      %v545 = vunpack.c.l.b16 %v219
      %v546 = vunpack.c.h.b16 %v219
      %v547 = vunpack.c.l.b16 %v220
      %v548 = vunpack.c.h.b16 %v220
      %v549 = vunpack.c.l.b16 %v221
      %v550 = vunpack.c.h.b16 %v221
      %v551 = vunpack.c.l.b16 %v222
      %v552 = vunpack.c.h.b16 %v222
      %v553 = vunpack.c.l.b16 %v223
      %v554 = vunpack.c.h.b16 %v223
      %v555 = vunpack.c.l.b16 %v224
      %v556 = vunpack.c.h.b16 %v224
      %v557 = vunpack.c.l.b16 %v225
      %v558 = vunpack.c.h.b16 %v225
      %v559 = vunpack.c.l.b16 %v226
      %v560 = vunpack.c.h.b16 %v226
      %v561 = vunpack.c.l.b16 %v227
      %v562 = vunpack.c.h.b16 %v227
      %v563 = vunpack.c.l.b16 %v228
      %v564 = vunpack.c.h.b16 %v228
      %v565 = vunpack.c.l.b16 %v229
      %v566 = vunpack.c.h.b16 %v229
      %v567 = vunpack.c.l.b16 %v230
      %v568 = vunpack.c.h.b16 %v230
      %v569 = vunpack.c.l.b16 %v231
      %v570 = vunpack.c.h.b16 %v231
      %v571 = vunpack.c.l.b16 %v232
      %v572 = vunpack.c.h.b16 %v232
      %v573 = vunpack.c.l.b16 %v233
      %v574 = vunpack.c.h.b16 %v233
      %v575 = vunpack.c.l.b16 %v234
      %v576 = vunpack.c.h.b16 %v234
      %v577 = vunpack.c.l.b16 %v235
      %v578 = vunpack.c.h.b16 %v235
      %v579 = vunpack.c.l.b16 %v236
      %v580 = vunpack.c.h.b16 %v236
      %v581 = vunpack.c.l.b16 %v237
      %v582 = vunpack.c.h.b16 %v237
      %v583 = vunpack.c.l.b16 %v238
      %v584 = vunpack.c.h.b16 %v238
      %v585 = vunpack.c.l.b16 %v239
      %v586 = vunpack.c.h.b16 %v239
      %v587 = vunpack.c.l.b16 %v240
      %v588 = vunpack.c.h.b16 %v240
      %v589 = vunpack.c.l.b16 %v241
      %v590 = vunpack.c.h.b16 %v241
      %v591 = vunpack.c.l.b16 %v242
      %v592 = vunpack.c.h.b16 %v242
      %v593 = vunpack.c.l.b16 %v243
      %v594 = vunpack.c.h.b16 %v243
      %v595 = vunpack.c.l.b16 %v244
      %v596 = vunpack.c.h.b16 %v244
      %v597 = vunpack.c.l.b16 %v245
      %v598 = vunpack.c.h.b16 %v245
      %v599 = vunpack.c.l.b16 %v246
      %v600 = vunpack.c.h.b16 %v246
      %v601 = vunpack.c.l.b16 %v247
      %v602 = vunpack.c.h.b16 %v247
      %v603 = vunpack.c.l.b16 %v248
      %v604 = vunpack.c.h.b16 %v248
      %v605 = vunpack.c.l.b16 %v249
      %v606 = vunpack.c.h.b16 %v249
      %v607 = vunpack.c.l.b16 %v250
      %v608 = vunpack.c.h.b16 %v250
      %v609 = vunpack.c.l.b16 %v251
      %v610 = vunpack.c.h.b16 %v251
      %v611 = vunpack.c.l.b16 %v252
      %v612 = vunpack.c.h.b16 %v252
      %v613 = vunpack.c.l.b16 %v253
      %v614 = vunpack.c.h.b16 %v253
      %v615 = vunpack.c.l.b16 %v254
      %v616 = vunpack.c.h.b16 %v254
      %v617 = vunpack.c.l.b16 %v255
      %v618 = vunpack.c.h.b16 %v255
      %v619 = vunpack.c.l.b16 %v256
      %v620 = vunpack.c.h.b16 %v256
      %v621 = vunpack.c.l.b16 %v257
      %v622 = vunpack.c.h.b16 %v257
      %v623 = vunpack.c.l.b16 %v258
      %v624 = vunpack.c.h.b16 %v258
      %v625 = vunpack.c.l.b16 %v259
      %v626 = vunpack.c.h.b16 %v259
      %v627 = vunpack.c.l.b16 %v260
      %v628 = vunpack.c.h.b16 %v260
      %v629 = vunpack.c.l.b16 %v261
      %v630 = vunpack.c.h.b16 %v261
      %v631 = vunpack.c.l.b16 %v262
      %v632 = vunpack.c.h.b16 %v262
      %v633 = vunpack.c.l.b16 %v263
      %v634 = vunpack.c.h.b16 %v263
      %v635 = vunpack.c.l.b16 %v264
      %v636 = vunpack.c.h.b16 %v264
      %v637 = vunpack.c.l.b16 %v265
      %v638 = vunpack.c.h.b16 %v265
      %v639 = vunpack.c.l.b16 %v266
      %v640 = vunpack.c.h.b16 %v266
      %v641 = vunpack.c.l.b16 %v267
      %v642 = vunpack.c.h.b16 %v267
      %v643 = vunpack.c.l.b16 %v268
      %v644 = vunpack.c.h.b16 %v268
      %v645 = vunpack.c.l.b16 %v269
      %v646 = vunpack.c.h.b16 %v269
      %v647 = vunpack.c.l.b16 %v270
      %v648 = vunpack.c.h.b16 %v270
      %v649 = vunpack.c.l.b16 %v271
      %v650 = vunpack.c.h.b16 %v271
      %v651 = vunpack.c.l.b16 %v272
      %v652 = vunpack.c.h.b16 %v272
      %v653 = vunpack.c.l.b16 %v273
      %v654 = vunpack.c.h.b16 %v273
      %v655 = vunpack.c.l.b16 %v274
      %v656 = vunpack.c.h.b16 %v274
      %v657 = vunpack.c.l.b16 %v275
      %v658 = vunpack.c.h.b16 %v275
      %v659 = vunpack.c.l.b16 %v276
      %v660 = vunpack.c.h.b16 %v276
      %v661 = vunpack.c.l.b16 %v277
      %v662 = vunpack.c.h.b16 %v277
      %v663 = vunpack.c.l.b16 %v278
      %v664 = vunpack.c.h.b16 %v278
      %v665 = vunpack.c.l.b16 %v279
      %v666 = vunpack.c.h.b16 %v279
      %v667 = vunpack.c.l.b16 %v280
      %v668 = vunpack.c.h.b16 %v280
      %v669 = vunpack.c.l.b16 %v281
      %v670 = vunpack.c.h.b16 %v281
      %v671 = vunpack.c.l.b16 %v282
      %v672 = vunpack.c.h.b16 %v282
      %v673 = vunpack.c.l.b16 %v283
      %v674 = vunpack.c.h.b16 %v283
      %v675 = vunpack.c.l.b16 %v284
      %v676 = vunpack.c.h.b16 %v284
      %v677 = vunpack.c.l.b16 %v285
      %v678 = vunpack.c.h.b16 %v285
      %v679 = vunpack.c.l.b16 %v286
      %v680 = vunpack.c.h.b16 %v286
      %v681 = vunpack.c.l.b16 %v287
      %v682 = vunpack.c.h.b16 %v287
      %v683 = vunpack.c.l.b16 %v288
      %v684 = vunpack.c.h.b16 %v288
      %v685 = vunpack.c.l.b16 %v289
      %v686 = vunpack.c.h.b16 %v289
      %v687 = vunpack.c.l.b16 %v290
      %v688 = vunpack.c.h.b16 %v290
      %v689 = vunpack.c.l.b16 %v291
      %v690 = vunpack.c.h.b16 %v291
      %v691 = vunpack.c.l.b16 %v292
      %v692 = vunpack.c.h.b16 %v292
      %v693 = vunpack.c.l.b16 %v293
      %v694 = vunpack.c.h.b16 %v293
      %v695 = vunpack.c.l.b16 %v294
      %v696 = vunpack.c.h.b16 %v294
      %v697 = vunpack.c.l.b16 %v295
      %v698 = vunpack.c.h.b16 %v295
      %v699 = vunpack.c.l.b16 %v296
      %v700 = vunpack.c.h.b16 %v296
      %v701 = vunpack.c.l.b16 %v297
      %v702 = vunpack.c.h.b16 %v297
      %v703 = vunpack.c.l.b16 %v298
      %v704 = vunpack.c.h.b16 %v298
      %v705 = vunpack.c.l.b16 %v299
      %v706 = vunpack.c.h.b16 %v299
      %v707 = vunpack.c.l.b16 %v300
      %v708 = vunpack.c.h.b16 %v300
      %v709 = vunpack.c.l.b16 %v301
      %v710 = vunpack.c.h.b16 %v301
      %v711 = vunpack.c.l.b16 %v302
      %v712 = vunpack.c.h.b16 %v302
      %v713 = vunpack.c.l.b16 %v303
      %v714 = vunpack.c.h.b16 %v303
      %v715 = vunpack.c.l.b16 %v304
      %v716 = vunpack.c.h.b16 %v304
      %v717 = vunpack.c.l.b16 %v305
      %v718 = vunpack.c.h.b16 %v305
      %v719 = vunpack.c.l.b16 %v306
      %v720 = vunpack.c.h.b16 %v306
      %v721 = vunpack.c.l.b16 %v307
      %v722 = vunpack.c.h.b16 %v307
      %v723 = vunpack.c.l.b16 %v308
      %v724 = vunpack.c.h.b16 %v308
      %v725 = vunpack.c.l.b16 %v309
      %v726 = vunpack.c.h.b16 %v309
      %v727 = vunpack.c.l.b16 %v310
      %v728 = vunpack.c.h.b16 %v310
      %v729 = vunpack.c.l.b16 %v311
      %v730 = vunpack.c.h.b16 %v311
      %v731 = vunpack.c.l.b16 %v312
      %v732 = vunpack.c.h.b16 %v312
      %v733 = vunpack.c.l.b16 %v313
      %v734 = vunpack.c.h.b16 %v313
      %v735 = vunpack.c.l.b16 %v314
      %v736 = vunpack.c.h.b16 %v314
      %v737 = vunpack.c.l.b16 %v315
      %v738 = vunpack.c.h.b16 %v315
      %v739 = vunpack.c.l.b16 %v316
      %v740 = vunpack.c.h.b16 %v316
      %v741 = vunpack.c.l.b16 %v317
      %v742 = vunpack.c.h.b16 %v317
      %v743 = vunpack.c.l.b16 %v318
      %v744 = vunpack.c.h.b16 %v318
      %v745 = vunpack.c.l.b16 %v319
      %v746 = vunpack.c.h.b16 %v319
      %v747 = vunpack.c.l.b16 %v320
      %v748 = vunpack.c.h.b16 %v320
      %v749 = vunpack.c.l.b16 %v321
      %v750 = vunpack.c.h.b16 %v321
      %v751 = vunpack.c.l.b16 %v322
      %v752 = vunpack.c.h.b16 %v322
      %v753 = vunpack.c.l.b16 %v323
      %v754 = vunpack.c.h.b16 %v323
      %v755 = vunpack.c.l.b16 %v324
      %v756 = vunpack.c.h.b16 %v324
      %v757 = vunpack.c.l.b16 %v325
      %v758 = vunpack.c.h.b16 %v325
      %v759 = vunpack.c.l.b16 %v326
      %v760 = vunpack.c.h.b16 %v326
      %v761 = vunpack.c.l.b16 %v327
      %v762 = vunpack.c.h.b16 %v327
      %v763 = vunpack.c.l.b16 %v328
      %v764 = vunpack.c.h.b16 %v328
      %v765 = vunpack.c.l.b16 %v329
      %v766 = vunpack.c.h.b16 %v329
      %v767 = vunpack.c.l.b16 %v330
      %v768 = vunpack.c.h.b16 %v330
      %v769 = vunpack.c.l.b16 %v331
      %v770 = vunpack.c.h.b16 %v331
      %v771 = vunpack.c.l.b16 %v332
      %v772 = vunpack.c.h.b16 %v332
      %v773 = vpack.c.b16 %v521, %v517
      %v774 = vpack.c.b16 %v522, %v518
      %v775 = vpack.c.b16 %v523, %v519
      %v776 = vpack.c.b16 %v524, %v520
      %v777 = vpack.c.b16 %v529, %v525
      %v778 = vpack.c.b16 %v530, %v526
      %v779 = vpack.c.b16 %v531, %v527
      %v780 = vpack.c.b16 %v532, %v528
      %v781 = vpack.c.b16 %v537, %v533
      %v782 = vpack.c.b16 %v538, %v534
      %v783 = vpack.c.b16 %v539, %v535
      %v784 = vpack.c.b16 %v540, %v536
      %v785 = vpack.c.b16 %v545, %v541
      %v786 = vpack.c.b16 %v546, %v542
      %v787 = vpack.c.b16 %v547, %v543
      %v788 = vpack.c.b16 %v548, %v544
      %v789 = vpack.c.b16 %v553, %v549
      %v790 = vpack.c.b16 %v554, %v550
      %v791 = vpack.c.b16 %v555, %v551
      %v792 = vpack.c.b16 %v556, %v552
      %v793 = vpack.c.b16 %v561, %v557
      %v794 = vpack.c.b16 %v562, %v558
      %v795 = vpack.c.b16 %v563, %v559
      %v796 = vpack.c.b16 %v564, %v560
      %v797 = vpack.c.b16 %v569, %v565
      %v798 = vpack.c.b16 %v570, %v566
      %v799 = vpack.c.b16 %v571, %v567
      %v800 = vpack.c.b16 %v572, %v568
      %v801 = vpack.c.b16 %v577, %v573
      %v802 = vpack.c.b16 %v578, %v574
      %v803 = vpack.c.b16 %v579, %v575
      %v804 = vpack.c.b16 %v580, %v576
      %v805 = vpack.c.b16 %v585, %v581
      %v806 = vpack.c.b16 %v586, %v582
      %v807 = vpack.c.b16 %v587, %v583
      %v808 = vpack.c.b16 %v588, %v584
      %v809 = vpack.c.b16 %v593, %v589
      %v810 = vpack.c.b16 %v594, %v590
      %v811 = vpack.c.b16 %v595, %v591
      %v812 = vpack.c.b16 %v596, %v592
      %v813 = vpack.c.b16 %v601, %v597
      %v814 = vpack.c.b16 %v602, %v598
      %v815 = vpack.c.b16 %v603, %v599
      %v816 = vpack.c.b16 %v604, %v600
      %v817 = vpack.c.b16 %v609, %v605
      %v818 = vpack.c.b16 %v610, %v606
      %v819 = vpack.c.b16 %v611, %v607
      %v820 = vpack.c.b16 %v612, %v608
      %v821 = vpack.c.b16 %v617, %v613
      %v822 = vpack.c.b16 %v618, %v614
      %v823 = vpack.c.b16 %v619, %v615
      %v824 = vpack.c.b16 %v620, %v616
      %v825 = vpack.c.b16 %v625, %v621
      %v826 = vpack.c.b16 %v626, %v622
      %v827 = vpack.c.b16 %v627, %v623
      %v828 = vpack.c.b16 %v628, %v624
      %v829 = vpack.c.b16 %v633, %v629
      %v830 = vpack.c.b16 %v634, %v630
      %v831 = vpack.c.b16 %v635, %v631
      %v832 = vpack.c.b16 %v636, %v632
      %v833 = vpack.c.b16 %v641, %v637
      %v834 = vpack.c.b16 %v642, %v638
      %v835 = vpack.c.b16 %v643, %v639
      %v836 = vpack.c.b16 %v644, %v640
      %v837 = vpack.c.b16 %v649, %v645
      %v838 = vpack.c.b16 %v650, %v646
      %v839 = vpack.c.b16 %v651, %v647
      %v840 = vpack.c.b16 %v652, %v648
      %v841 = vpack.c.b16 %v657, %v653
      %v842 = vpack.c.b16 %v658, %v654
      %v843 = vpack.c.b16 %v659, %v655
      %v844 = vpack.c.b16 %v660, %v656
      %v845 = vpack.c.b16 %v665, %v661
      %v846 = vpack.c.b16 %v666, %v662
      %v847 = vpack.c.b16 %v667, %v663
      %v848 = vpack.c.b16 %v668, %v664
      %v849 = vpack.c.b16 %v673, %v669
      %v850 = vpack.c.b16 %v674, %v670
      %v851 = vpack.c.b16 %v675, %v671
      %v852 = vpack.c.b16 %v676, %v672
      %v853 = vpack.c.b16 %v681, %v677
      %v854 = vpack.c.b16 %v682, %v678
      %v855 = vpack.c.b16 %v683, %v679
      %v856 = vpack.c.b16 %v684, %v680
      %v857 = vpack.c.b16 %v689, %v685
      %v858 = vpack.c.b16 %v690, %v686
      %v859 = vpack.c.b16 %v691, %v687
      %v860 = vpack.c.b16 %v692, %v688
      %v861 = vpack.c.b16 %v697, %v693
      %v862 = vpack.c.b16 %v698, %v694
      %v863 = vpack.c.b16 %v699, %v695
      %v864 = vpack.c.b16 %v700, %v696
      %v865 = vpack.c.b16 %v705, %v701
      %v866 = vpack.c.b16 %v706, %v702
      %v867 = vpack.c.b16 %v707, %v703
      %v868 = vpack.c.b16 %v708, %v704
      %v869 = vpack.c.b16 %v713, %v709
      %v870 = vpack.c.b16 %v714, %v710
      %v871 = vpack.c.b16 %v715, %v711
      %v872 = vpack.c.b16 %v716, %v712
      %v873 = vpack.c.b16 %v721, %v717
      %v874 = vpack.c.b16 %v722, %v718
      %v875 = vpack.c.b16 %v723, %v719
      %v876 = vpack.c.b16 %v724, %v720
      %v877 = vpack.c.b16 %v729, %v725
      %v878 = vpack.c.b16 %v730, %v726
      %v879 = vpack.c.b16 %v731, %v727
      %v880 = vpack.c.b16 %v732, %v728
      %v881 = vpack.c.b16 %v737, %v733
      %v882 = vpack.c.b16 %v738, %v734
      %v883 = vpack.c.b16 %v739, %v735
      %v884 = vpack.c.b16 %v740, %v736
      %v885 = vpack.c.b16 %v745, %v741
      %v886 = vpack.c.b16 %v746, %v742
      %v887 = vpack.c.b16 %v747, %v743
      %v888 = vpack.c.b16 %v748, %v744
      %v889 = vpack.c.b16 %v753, %v749
      %v890 = vpack.c.b16 %v754, %v750
      %v891 = vpack.c.b16 %v755, %v751
      %v892 = vpack.c.b16 %v756, %v752
      %v893 = vpack.c.b16 %v761, %v757
      %v894 = vpack.c.b16 %v762, %v758
      %v895 = vpack.c.b16 %v763, %v759
      %v896 = vpack.c.b16 %v764, %v760
      %v897 = vpack.c.b16 %v769, %v765
      %v898 = vpack.c.b16 %v770, %v766
      %v899 = vpack.c.b16 %v771, %v767
      %v900 = vpack.c.b16 %v772, %v768
      %v1053 = vunpack.c.l.b16 %v333
      %v1054 = vunpack.c.l.b16 %v334
      %v1055 = vunpack.c.l.b16 %v335
      %v1056 = vunpack.c.l.b16 %v336
      %v1057 = vunpack.c.l.b16 %v337
      %v1058 = vunpack.c.l.b16 %v338
      %v1059 = vunpack.c.l.b16 %v339
      %v1060 = vunpack.c.l.b16 %v340
      %v1061 = vunpack.c.l.b16 %v341
      %v1062 = vunpack.c.l.b16 %v342
      %v1063 = vunpack.c.l.b16 %v343
      %v1064 = vunpack.c.l.b16 %v344
      %v1065 = vunpack.c.l.b16 %v345
      %v1066 = vunpack.c.l.b16 %v346
      %v1067 = vunpack.c.l.b16 %v347
      %v1068 = vunpack.c.l.b16 %v348
      %v1069 = vunpack.c.l.b16 %v349
      %v1070 = vunpack.c.l.b16 %v350
      %v1071 = vunpack.c.l.b16 %v351
      %v1072 = vunpack.c.l.b16 %v352
      %v1073 = vunpack.c.l.b16 %v353
      %v1074 = vunpack.c.l.b16 %v354
      %v1075 = vunpack.c.l.b16 %v355
      %v1076 = vunpack.c.l.b16 %v356
      %v1077 = vunpack.c.l.b16 %v357
      %v1078 = vunpack.c.l.b16 %v358
      %v1079 = vunpack.c.l.b16 %v359
      %v1080 = vunpack.c.l.b16 %v360
      %v1081 = vunpack.c.l.b16 %v361
      %v1082 = vunpack.c.l.b16 %v362
      %v1083 = vunpack.c.l.b16 %v363
      %v1084 = vunpack.c.l.b16 %v364
      %v1085 = vunpack.c.l.b16 %v365
      %v1086 = vunpack.c.l.b16 %v366
      %v1087 = vunpack.c.l.b16 %v367
      %v1088 = vunpack.c.l.b16 %v368
      %v1089 = vunpack.c.l.b16 %v369
      %v1090 = vunpack.c.l.b16 %v370
      %v1091 = vunpack.c.l.b16 %v371
      %v1092 = vunpack.c.l.b16 %v372
      %v1093 = vunpack.c.l.b16 %v373
      %v1094 = vunpack.c.l.b16 %v374
      %v1095 = vunpack.c.l.b16 %v375
      %v1096 = vunpack.c.l.b16 %v376
      %v1097 = vunpack.c.l.b16 %v377
      %v1098 = vunpack.c.l.b16 %v378
      %v1099 = vunpack.c.l.b16 %v379
      %v1100 = vunpack.c.l.b16 %v380
      %v1101 = vunpack.c.l.b16 %v381
      %v1102 = vunpack.c.l.b16 %v382
      %v1103 = vunpack.c.l.b16 %v383
      %v1104 = vunpack.c.l.b16 %v384
      %v1105 = vunpack.c.l.b16 %v385
      %v1106 = vunpack.c.l.b16 %v386
      %v1107 = vunpack.c.l.b16 %v387
      %v1108 = vunpack.c.l.b16 %v388
      %v1109 = vpack.c.b16 %v1054, %v1053
      %v1110 = vpack.c.b16 %v1056, %v1055
      %v1111 = vpack.c.b16 %v1058, %v1057
      %v1112 = vpack.c.b16 %v1060, %v1059
      %v1113 = vpack.c.b16 %v1062, %v1061
      %v1114 = vpack.c.b16 %v1064, %v1063
      %v1115 = vpack.c.b16 %v1066, %v1065
      %v1116 = vpack.c.b16 %v1068, %v1067
      %v1117 = vpack.c.b16 %v1070, %v1069
      %v1118 = vpack.c.b16 %v1072, %v1071
      %v1119 = vpack.c.b16 %v1074, %v1073
      %v1120 = vpack.c.b16 %v1076, %v1075
      %v1121 = vpack.c.b16 %v1078, %v1077
      %v1122 = vpack.c.b16 %v1080, %v1079
      %v1123 = vpack.c.b16 %v1082, %v1081
      %v1124 = vpack.c.b16 %v1084, %v1083
      %v1125 = vpack.c.b16 %v1086, %v1085
      %v1126 = vpack.c.b16 %v1088, %v1087
      %v1127 = vpack.c.b16 %v1090, %v1089
      %v1128 = vpack.c.b16 %v1092, %v1091
      %v1129 = vpack.c.b16 %v1094, %v1093
      %v1130 = vpack.c.b16 %v1096, %v1095
      %v1131 = vpack.c.b16 %v1098, %v1097
      %v1132 = vpack.c.b16 %v1100, %v1099
      %v1133 = vpack.c.b16 %v1102, %v1101
      %v1134 = vpack.c.b16 %v1104, %v1103
      %v1135 = vpack.c.b16 %v1106, %v1105
      %v1136 = vpack.c.b16 %v1108, %v1107
      %vm1164 = vcmask 465920
      %v1166 = vsel %vm1164, %v776, 0
      %v1169 = vsel %vm1164, %v780, 0
      %v1172 = vsel %vm1164, %v784, 0
      %v1175 = vsel %vm1164, %v788, 0
      %v1178 = vsel %vm1164, %v792, 0
      %v1181 = vsel %vm1164, %v796, 0
      %v1184 = vsel %vm1164, %v800, 0
      %v1187 = vsel %vm1164, %v804, 0
      %v1190 = vsel %vm1164, %v808, 0
      %v1193 = vsel %vm1164, %v812, 0
      %v1196 = vsel %vm1164, %v816, 0
      %v1199 = vsel %vm1164, %v820, 0
      %v1202 = vsel %vm1164, %v824, 0
      %v1205 = vsel %vm1164, %v828, 0
      %v1208 = vsel %vm1164, %v832, 0
      %v1211 = vsel %vm1164, %v836, 0
      %v1214 = vsel %vm1164, %v840, 0
      %v1217 = vsel %vm1164, %v844, 0
      %v1220 = vsel %vm1164, %v848, 0
      %v1223 = vsel %vm1164, %v852, 0
      %v1226 = vsel %vm1164, %v856, 0
      %v1229 = vsel %vm1164, %v860, 0
      %v1232 = vsel %vm1164, %v864, 0
      %v1235 = vsel %vm1164, %v868, 0
      %v1238 = vsel %vm1164, %v872, 0
      %v1241 = vsel %vm1164, %v876, 0
      %v1244 = vsel %vm1164, %v880, 0
      %v1247 = vsel %vm1164, %v884, 0
      %v1250 = vsel %vm1164, %v888, 0
      %v1253 = vsel %vm1164, %v892, 0
      %v1256 = vsel %vm1164, %v896, 0
      %v1259 = vsel %vm1164, %v900, 0
      %vm1261 = vcmask 1043456
      %vm1262 = vcmask 1044480
      %v1263 = vsel %vm1261, 4294967295, 65535
      %v1264 = vsel %vm1262, %v1263, 0
      %v1266 = vand.u32 %v1136, %v1264
      %1268 = vmatprep.subr.bf16.mxu0 0
      %1269 = vmatpush1.bf16.msra.mxu0 %v1109
      %1270 = vmatprep.subr.bf16.mxu0 0
      %1271 = vmatpush1.bf16.msra.mxu0 %v1110
      %1272 = vmatprep.subr.bf16.mxu0 0
      %1273 = vmatpush1.bf16.msra.mxu0 %v1111
      %1274 = vmatprep.subr.bf16.mxu0 0
      %1275 = vmatpush1.bf16.msra.mxu0 %v1112
      %1276 = vmatprep.subr.bf16.mxu0 0
      %1277 = vmatpush1.bf16.msra.mxu0 %v1113
      %1278 = vmatprep.subr.bf16.mxu0 0
      %1279 = vmatpush1.bf16.msra.mxu0 %v1114
      %1280 = vmatprep.subr.bf16.mxu0 0
      %1281 = vmatpush1.bf16.msra.mxu0 %v1115
      %1282 = vmatprep.subr.bf16.mxu0 0
      %1283 = vmatpush1.bf16.msra.mxu0 %v1116
      %1284 = vmatprep.subr.bf16.mxu0 0
      %1285 = vmatpush1.bf16.msra.mxu0 %v1117
      %1286 = vmatprep.subr.bf16.mxu0 0
      %1287 = vmatpush1.bf16.msra.mxu0 %v1118
      %1288 = vmatprep.subr.bf16.mxu0 0
      %1289 = vmatpush1.bf16.msra.mxu0 %v1119
      %1290 = vmatprep.subr.bf16.mxu0 0
      %1291 = vmatpush1.bf16.msra.mxu0 %v1120
      %1292 = vmatprep.subr.bf16.mxu0 0
      %1293 = vmatpush1.bf16.msra.mxu0 %v1121
      %1294 = vmatprep.subr.bf16.mxu0 0
      %1295 = vmatpush1.bf16.msra.mxu0 %v1122
      %1296 = vmatprep.subr.bf16.mxu0 0
      %1297 = vmatpush1.bf16.msra.mxu0 %v1123
      %1298 = vmatprep.subr.bf16.mxu0 0
      %1299 = vmatpush1.bf16.msra.mxu0 %v1124
      %1300 = vmatprep.mubr.bf16.mxu0 %v774
      %1301 = vmatmul.mubr.bf16.gmra.mrb[0].mxu0 %v773
      %v1302 = vpop.f32.mrb[0].mxu0
      %v1303 = vadd.f32 0.0, %v1302
      %v1304 = vpop.f32.mrb[0].mxu0
      %v1305 = vpop.f32.mrb[0].mxu0
      %v1306 = vadd.f32 0.0, %v1305
      %v1307 = vpop.f32.mrb[0].mxu0
      %1308 = vmatprep.mubr.bf16.mxu0 %v778
      %1309 = vmatmul.mubr.bf16.gmra.mrb[0].mxu0 %v777
      %v1310 = vpop.f32.mrb[0].mxu0
      %v1311 = vadd.f32 0.0, %v1310
      %v1312 = vpop.f32.mrb[0].mxu0
      %v1313 = vpop.f32.mrb[0].mxu0
      %v1314 = vadd.f32 0.0, %v1313
      %v1315 = vpop.f32.mrb[0].mxu0
      %1316 = vmatprep.mubr.bf16.mxu0 %v782
      %1317 = vmatmul.mubr.bf16.gmra.mrb[0].mxu0 %v781
      %v1318 = vpop.f32.mrb[0].mxu0
      %v1319 = vadd.f32 0.0, %v1318
      %v1320 = vpop.f32.mrb[0].mxu0
      %v1321 = vpop.f32.mrb[0].mxu0
      %v1322 = vadd.f32 0.0, %v1321
      %v1323 = vpop.f32.mrb[0].mxu0
      %1324 = vmatprep.mubr.bf16.mxu0 %v786
      %1325 = vmatmul.mubr.bf16.gmra.mrb[0].mxu0 %v785
      %v1326 = vpop.f32.mrb[0].mxu0
      %v1327 = vadd.f32 0.0, %v1326
      %v1328 = vpop.f32.mrb[0].mxu0
      %v1329 = vpop.f32.mrb[0].mxu0
      %v1330 = vadd.f32 0.0, %v1329
      %v1331 = vpop.f32.mrb[0].mxu0
      %1332 = vmatprep.mubr.bf16.mxu0 %v790
      %1333 = vmatmul.mubr.bf16.gmra.mrb[0].mxu0 %v789
      %v1334 = vpop.f32.mrb[0].mxu0
      %v1335 = vadd.f32 0.0, %v1334
      %v1336 = vpop.f32.mrb[0].mxu0
      %v1337 = vpop.f32.mrb[0].mxu0
      %v1338 = vadd.f32 0.0, %v1337
      %v1339 = vpop.f32.mrb[0].mxu0
      %1340 = vmatprep.mubr.bf16.mxu0 %v794
      %1341 = vmatmul.mubr.bf16.gmra.mrb[0].mxu0 %v793
      %v1342 = vpop.f32.mrb[0].mxu0
      %v1343 = vadd.f32 0.0, %v1342
      %v1344 = vpop.f32.mrb[0].mxu0
      %v1345 = vpop.f32.mrb[0].mxu0
      %v1346 = vadd.f32 0.0, %v1345
      %v1347 = vpop.f32.mrb[0].mxu0
      %1348 = vmatprep.mubr.bf16.mxu0 %v798
      %1349 = vmatmul.mubr.bf16.gmra.mrb[0].mxu0 %v797
      %v1350 = vpop.f32.mrb[0].mxu0
      %v1351 = vadd.f32 0.0, %v1350
      %v1352 = vpop.f32.mrb[0].mxu0
      %v1353 = vpop.f32.mrb[0].mxu0
      %v1354 = vadd.f32 0.0, %v1353
      %v1355 = vpop.f32.mrb[0].mxu0
      %1356 = vmatprep.mubr.bf16.mxu0 %v802
      %1357 = vmatmul.mubr.bf16.gmra.mrb[0].mxu0 %v801
      %v1358 = vpop.f32.mrb[0].mxu0
      %v1359 = vadd.f32 0.0, %v1358
      %v1360 = vpop.f32.mrb[0].mxu0
      %v1361 = vpop.f32.mrb[0].mxu0
      %v1362 = vadd.f32 0.0, %v1361
      %v1363 = vpop.f32.mrb[0].mxu0
      %1364 = vmatprep.mubr.bf16.mxu0 %v806
      %1365 = vmatmul.mubr.bf16.gmra.mrb[0].mxu0 %v805
      %v1366 = vpop.f32.mrb[0].mxu0
      %v1367 = vadd.f32 0.0, %v1366
      %v1368 = vpop.f32.mrb[0].mxu0
      %v1369 = vpop.f32.mrb[0].mxu0
      %v1370 = vadd.f32 0.0, %v1369
      %v1371 = vpop.f32.mrb[0].mxu0
      %1372 = vmatprep.mubr.bf16.mxu0 %v810
      %1373 = vmatmul.mubr.bf16.gmra.mrb[0].mxu0 %v809
      %v1374 = vpop.f32.mrb[0].mxu0
      %v1375 = vadd.f32 0.0, %v1374
      %v1376 = vpop.f32.mrb[0].mxu0
      %v1377 = vpop.f32.mrb[0].mxu0
      %v1378 = vadd.f32 0.0, %v1377
      %v1379 = vpop.f32.mrb[0].mxu0
      %1380 = vmatprep.mubr.bf16.mxu0 %v814
      %1381 = vmatmul.mubr.bf16.gmra.mrb[0].mxu0 %v813
      %v1382 = vpop.f32.mrb[0].mxu0
      %v1383 = vadd.f32 0.0, %v1382
      %v1384 = vpop.f32.mrb[0].mxu0
      %v1385 = vpop.f32.mrb[0].mxu0
      %v1386 = vadd.f32 0.0, %v1385
      %v1387 = vpop.f32.mrb[0].mxu0
      %1388 = vmatprep.mubr.bf16.mxu0 %v818
      %1389 = vmatmul.mubr.bf16.gmra.mrb[0].mxu0 %v817
      %v1390 = vpop.f32.mrb[0].mxu0
      %v1391 = vadd.f32 0.0, %v1390
      %v1392 = vpop.f32.mrb[0].mxu0
      %v1393 = vpop.f32.mrb[0].mxu0
      %v1394 = vadd.f32 0.0, %v1393
      %v1395 = vpop.f32.mrb[0].mxu0
      %1396 = vmatprep.mubr.bf16.mxu0 %v822
      %1397 = vmatmul.mubr.bf16.gmra.mrb[0].mxu0 %v821
      %v1398 = vpop.f32.mrb[0].mxu0
      %v1399 = vadd.f32 0.0, %v1398
      %v1400 = vpop.f32.mrb[0].mxu0
      %v1401 = vpop.f32.mrb[0].mxu0
      %v1402 = vadd.f32 0.0, %v1401
      %v1403 = vpop.f32.mrb[0].mxu0
      %1404 = vmatprep.mubr.bf16.mxu0 %v826
      %1405 = vmatmul.mubr.bf16.gmra.mrb[0].mxu0 %v825
      %v1406 = vpop.f32.mrb[0].mxu0
      %v1407 = vadd.f32 0.0, %v1406
      %v1408 = vpop.f32.mrb[0].mxu0
      %v1409 = vpop.f32.mrb[0].mxu0
      %v1410 = vadd.f32 0.0, %v1409
      %v1411 = vpop.f32.mrb[0].mxu0
      %1412 = vmatprep.mubr.bf16.mxu0 %v830
      %1413 = vmatmul.mubr.bf16.gmra.mrb[0].mxu0 %v829
      %v1414 = vpop.f32.mrb[0].mxu0
      %v1415 = vadd.f32 0.0, %v1414
      %v1416 = vpop.f32.mrb[0].mxu0
      %v1417 = vpop.f32.mrb[0].mxu0
      %v1418 = vadd.f32 0.0, %v1417
      %v1419 = vpop.f32.mrb[0].mxu0
      %1420 = vmatprep.mubr.bf16.mxu0 %v834
      %1421 = vmatmul.mubr.bf16.gmra.mrb[0].mxu0 %v833
      %v1422 = vpop.f32.mrb[0].mxu0
      %v1423 = vadd.f32 0.0, %v1422
      %v1424 = vpop.f32.mrb[0].mxu0
      %v1425 = vpop.f32.mrb[0].mxu0
      %v1426 = vadd.f32 0.0, %v1425
      %v1427 = vpop.f32.mrb[0].mxu0
      %1428 = vmatprep.mubr.bf16.mxu0 %v838
      %1429 = vmatmul.mubr.bf16.gmra.mrb[0].mxu0 %v837
      %v1430 = vpop.f32.mrb[0].mxu0
      %v1431 = vadd.f32 0.0, %v1430
      %v1432 = vpop.f32.mrb[0].mxu0
      %v1433 = vpop.f32.mrb[0].mxu0
      %v1434 = vadd.f32 0.0, %v1433
      %v1435 = vpop.f32.mrb[0].mxu0
      %1436 = vmatprep.mubr.bf16.mxu0 %v842
      %1437 = vmatmul.mubr.bf16.gmra.mrb[0].mxu0 %v841
      %v1438 = vpop.f32.mrb[0].mxu0
      %v1439 = vadd.f32 0.0, %v1438
      %v1440 = vpop.f32.mrb[0].mxu0
      %v1441 = vpop.f32.mrb[0].mxu0
      %v1442 = vadd.f32 0.0, %v1441
      %v1443 = vpop.f32.mrb[0].mxu0
      %1444 = vmatprep.mubr.bf16.mxu0 %v846
      %1445 = vmatmul.mubr.bf16.gmra.mrb[0].mxu0 %v845
      %v1446 = vpop.f32.mrb[0].mxu0
      %v1447 = vadd.f32 0.0, %v1446
      %v1448 = vpop.f32.mrb[0].mxu0
      %v1449 = vpop.f32.mrb[0].mxu0
      %v1450 = vadd.f32 0.0, %v1449
      %v1451 = vpop.f32.mrb[0].mxu0
      %1452 = vmatprep.mubr.bf16.mxu0 %v850
      %1453 = vmatmul.mubr.bf16.gmra.mrb[0].mxu0 %v849
      %v1454 = vpop.f32.mrb[0].mxu0
      %v1455 = vadd.f32 0.0, %v1454
      %v1456 = vpop.f32.mrb[0].mxu0
      %v1457 = vpop.f32.mrb[0].mxu0
      %v1458 = vadd.f32 0.0, %v1457
      %v1459 = vpop.f32.mrb[0].mxu0
      %1460 = vmatprep.mubr.bf16.mxu0 %v854
      %1461 = vmatmul.mubr.bf16.gmra.mrb[0].mxu0 %v853
      %v1462 = vpop.f32.mrb[0].mxu0
      %v1463 = vadd.f32 0.0, %v1462
      %v1464 = vpop.f32.mrb[0].mxu0
      %v1465 = vpop.f32.mrb[0].mxu0
      %v1466 = vadd.f32 0.0, %v1465
      %v1467 = vpop.f32.mrb[0].mxu0
      %1468 = vmatprep.mubr.bf16.mxu0 %v858
      %1469 = vmatmul.mubr.bf16.gmra.mrb[0].mxu0 %v857
      %v1470 = vpop.f32.mrb[0].mxu0
      %v1471 = vadd.f32 0.0, %v1470
      %v1472 = vpop.f32.mrb[0].mxu0
      %v1473 = vpop.f32.mrb[0].mxu0
      %v1474 = vadd.f32 0.0, %v1473
      %v1475 = vpop.f32.mrb[0].mxu0
      %1476 = vmatprep.mubr.bf16.mxu0 %v862
      %1477 = vmatmul.mubr.bf16.gmra.mrb[0].mxu0 %v861
      %v1478 = vpop.f32.mrb[0].mxu0
      %v1479 = vadd.f32 0.0, %v1478
      %v1480 = vpop.f32.mrb[0].mxu0
      %v1481 = vpop.f32.mrb[0].mxu0
      %v1482 = vadd.f32 0.0, %v1481
      %v1483 = vpop.f32.mrb[0].mxu0
      %1484 = vmatprep.mubr.bf16.mxu0 %v866
      %1485 = vmatmul.mubr.bf16.gmra.mrb[0].mxu0 %v865
      %v1486 = vpop.f32.mrb[0].mxu0
      %v1487 = vadd.f32 0.0, %v1486
      %v1488 = vpop.f32.mrb[0].mxu0
      %v1489 = vpop.f32.mrb[0].mxu0
      %v1490 = vadd.f32 0.0, %v1489
      %v1491 = vpop.f32.mrb[0].mxu0
      %1492 = vmatprep.mubr.bf16.mxu0 %v870
      %1493 = vmatmul.mubr.bf16.gmra.mrb[0].mxu0 %v869
      %v1494 = vpop.f32.mrb[0].mxu0
      %v1495 = vadd.f32 0.0, %v1494
      %v1496 = vpop.f32.mrb[0].mxu0
      %v1497 = vpop.f32.mrb[0].mxu0
      %v1498 = vadd.f32 0.0, %v1497
      %v1499 = vpop.f32.mrb[0].mxu0
      %1500 = vmatprep.mubr.bf16.mxu0 %v874
      %1501 = vmatmul.mubr.bf16.gmra.mrb[0].mxu0 %v873
      %v1502 = vpop.f32.mrb[0].mxu0
      %v1503 = vadd.f32 0.0, %v1502
      %v1504 = vpop.f32.mrb[0].mxu0
      %v1505 = vpop.f32.mrb[0].mxu0
      %v1506 = vadd.f32 0.0, %v1505
      %v1507 = vpop.f32.mrb[0].mxu0
      %1508 = vmatprep.mubr.bf16.mxu0 %v878
      %1509 = vmatmul.mubr.bf16.gmra.mrb[0].mxu0 %v877
      %v1510 = vpop.f32.mrb[0].mxu0
      %v1511 = vadd.f32 0.0, %v1510
      %v1512 = vpop.f32.mrb[0].mxu0
      %v1513 = vpop.f32.mrb[0].mxu0
      %v1514 = vadd.f32 0.0, %v1513
      %v1515 = vpop.f32.mrb[0].mxu0
      %1516 = vmatprep.mubr.bf16.mxu0 %v882
      %1517 = vmatmul.mubr.bf16.gmra.mrb[0].mxu0 %v881
      %v1518 = vpop.f32.mrb[0].mxu0
      %v1519 = vadd.f32 0.0, %v1518
      %v1520 = vpop.f32.mrb[0].mxu0
      %v1521 = vpop.f32.mrb[0].mxu0
      %v1522 = vadd.f32 0.0, %v1521
      %v1523 = vpop.f32.mrb[0].mxu0
      %1524 = vmatprep.mubr.bf16.mxu0 %v886
      %1525 = vmatmul.mubr.bf16.gmra.mrb[0].mxu0 %v885
      %v1526 = vpop.f32.mrb[0].mxu0
      %v1527 = vadd.f32 0.0, %v1526
      %v1528 = vpop.f32.mrb[0].mxu0
      %v1529 = vpop.f32.mrb[0].mxu0
      %v1530 = vadd.f32 0.0, %v1529
      %v1531 = vpop.f32.mrb[0].mxu0
      %1532 = vmatprep.mubr.bf16.mxu0 %v890
      %1533 = vmatmul.mubr.bf16.gmra.mrb[0].mxu0 %v889
      %v1534 = vpop.f32.mrb[0].mxu0
      %v1535 = vadd.f32 0.0, %v1534
      %v1536 = vpop.f32.mrb[0].mxu0
      %v1537 = vpop.f32.mrb[0].mxu0
      %v1538 = vadd.f32 0.0, %v1537
      %v1539 = vpop.f32.mrb[0].mxu0
      %1540 = vmatprep.mubr.bf16.mxu0 %v894
      %1541 = vmatmul.mubr.bf16.gmra.mrb[0].mxu0 %v893
      %v1542 = vpop.f32.mrb[0].mxu0
      %v1543 = vadd.f32 0.0, %v1542
      %v1544 = vpop.f32.mrb[0].mxu0
      %v1545 = vpop.f32.mrb[0].mxu0
      %v1546 = vadd.f32 0.0, %v1545
      %v1547 = vpop.f32.mrb[0].mxu0
      %1548 = vmatprep.mubr.bf16.mxu0 %v898
      %1549 = vmatmul.mubr.bf16.gmra.mrb[0].mxu0 %v897
      %v1550 = vpop.f32.mrb[0].mxu0
      %v1551 = vadd.f32 0.0, %v1550
      %v1552 = vpop.f32.mrb[0].mxu0
      %v1553 = vpop.f32.mrb[0].mxu0
      %v1554 = vadd.f32 0.0, %v1553
      %v1555 = vpop.f32.mrb[0].mxu0
      %1556 = vdwg.mxu0
      %1557 = vmatprep.subr.bf16.mxu0 0
      %1558 = vmatpush1.bf16.msra.mxu0 %v1125
      %1559 = vmatprep.subr.bf16.mxu0 0
      %1560 = vmatpush1.bf16.msra.mxu0 %v1126
      %1561 = vmatprep.subr.bf16.mxu0 0
      %1562 = vmatpush1.bf16.msra.mxu0 %v1127
      %1563 = vmatprep.subr.bf16.mxu0 0
      %1564 = vmatpush1.bf16.msra.mxu0 %v1128
      %1565 = vmatprep.subr.bf16.mxu0 0
      %1566 = vmatpush1.bf16.msra.mxu0 %v1129
      %1567 = vmatprep.subr.bf16.mxu0 0
      %1568 = vmatpush1.bf16.msra.mxu0 %v1130
      %1569 = vmatprep.subr.bf16.mxu0 0
      %1570 = vmatpush1.bf16.msra.mxu0 %v1131
      %1571 = vmatprep.subr.bf16.mxu0 0
      %1572 = vmatpush1.bf16.msra.mxu0 %v1132
      %1573 = vmatprep.subr.bf16.mxu0 0
      %1574 = vmatpush1.bf16.msra.mxu0 %v1133
      %1575 = vmatprep.subr.bf16.mxu0 0
      %1576 = vmatpush1.bf16.msra.mxu0 %v1134
      %1577 = vmatprep.subr.bf16.mxu0 0
      %1578 = vmatpush1.bf16.msra.mxu0 %v1135
      %1579 = vmatprep.subr.bf16.mxu0 0
      %1580 = vmatpush1.bf16.msra.mxu0 %v1266
      %1581 = vmatprep.subr.bf16.mxu0 0
      %1582 = vmatpush1.bf16.msra.mxu0 0
      %1583 = vmatprep.subr.bf16.mxu0 0
      %1584 = vmatpush1.bf16.msra.mxu0 0
      %1585 = vmatprep.subr.bf16.mxu0 0
      %1586 = vmatpush1.bf16.msra.mxu0 0
      %1587 = vmatprep.subr.bf16.mxu0 0
      %1588 = vmatpush1.bf16.msra.mxu0 0
      %1589 = vmatprep.mubr.bf16.mxu0 %v1166
      %1590 = vmatmul.mubr.bf16.gmra.mrb[0].mxu0 %v775
      %v1591 = vpop.f32.mrb[0].mxu0
      %v1592 = vadd.f32 %v1303, %v1591
      %v1593 = vpop.f32.mrb[0].mxu0
      %v1594 = vpop.f32.mrb[0].mxu0
      %v1595 = vadd.f32 %v1306, %v1594
      %v1596 = vpop.f32.mrb[0].mxu0
      %1597 = vmatprep.mubr.bf16.mxu0 %v1169
      %1598 = vmatmul.mubr.bf16.gmra.mrb[0].mxu0 %v779
      %v1599 = vpop.f32.mrb[0].mxu0
      %v1600 = vadd.f32 %v1311, %v1599
      %v1601 = vpop.f32.mrb[0].mxu0
      %v1602 = vpop.f32.mrb[0].mxu0
      %v1603 = vadd.f32 %v1314, %v1602
      %v1604 = vpop.f32.mrb[0].mxu0
      %1605 = vmatprep.mubr.bf16.mxu0 %v1172
      %1606 = vmatmul.mubr.bf16.gmra.mrb[0].mxu0 %v783
      %v1607 = vpop.f32.mrb[0].mxu0
      %v1608 = vadd.f32 %v1319, %v1607
      %v1609 = vpop.f32.mrb[0].mxu0
      %v1610 = vpop.f32.mrb[0].mxu0
      %v1611 = vadd.f32 %v1322, %v1610
      %v1612 = vpop.f32.mrb[0].mxu0
      %1613 = vmatprep.mubr.bf16.mxu0 %v1175
      %1614 = vmatmul.mubr.bf16.gmra.mrb[0].mxu0 %v787
      %v1615 = vpop.f32.mrb[0].mxu0
      %v1616 = vadd.f32 %v1327, %v1615
      %v1617 = vpop.f32.mrb[0].mxu0
      %v1618 = vpop.f32.mrb[0].mxu0
      %v1619 = vadd.f32 %v1330, %v1618
      %v1620 = vpop.f32.mrb[0].mxu0
      %1621 = vmatprep.mubr.bf16.mxu0 %v1178
      %1622 = vmatmul.mubr.bf16.gmra.mrb[0].mxu0 %v791
      %v1623 = vpop.f32.mrb[0].mxu0
      %v1624 = vadd.f32 %v1335, %v1623
      %v1625 = vpop.f32.mrb[0].mxu0
      %v1626 = vpop.f32.mrb[0].mxu0
      %v1627 = vadd.f32 %v1338, %v1626
      %v1628 = vpop.f32.mrb[0].mxu0
      %1629 = vmatprep.mubr.bf16.mxu0 %v1181
      %1630 = vmatmul.mubr.bf16.gmra.mrb[0].mxu0 %v795
      %v1631 = vpop.f32.mrb[0].mxu0
      %v1632 = vadd.f32 %v1343, %v1631
      %v1633 = vpop.f32.mrb[0].mxu0
      %v1634 = vpop.f32.mrb[0].mxu0
      %v1635 = vadd.f32 %v1346, %v1634
      %v1636 = vpop.f32.mrb[0].mxu0
      %1637 = vmatprep.mubr.bf16.mxu0 %v1184
      %1638 = vmatmul.mubr.bf16.gmra.mrb[0].mxu0 %v799
      %v1639 = vpop.f32.mrb[0].mxu0
      %v1640 = vadd.f32 %v1351, %v1639
      %v1641 = vpop.f32.mrb[0].mxu0
      %v1642 = vpop.f32.mrb[0].mxu0
      %v1643 = vadd.f32 %v1354, %v1642
      %v1644 = vpop.f32.mrb[0].mxu0
      %1645 = vmatprep.mubr.bf16.mxu0 %v1187
      %1646 = vmatmul.mubr.bf16.gmra.mrb[0].mxu0 %v803
      %v1647 = vpop.f32.mrb[0].mxu0
      %v1648 = vadd.f32 %v1359, %v1647
      %v1649 = vpop.f32.mrb[0].mxu0
      %v1650 = vpop.f32.mrb[0].mxu0
      %v1651 = vadd.f32 %v1362, %v1650
      %v1652 = vpop.f32.mrb[0].mxu0
      %1653 = vmatprep.mubr.bf16.mxu0 %v1190
      %1654 = vmatmul.mubr.bf16.gmra.mrb[0].mxu0 %v807
      %v1655 = vpop.f32.mrb[0].mxu0
      %v1656 = vadd.f32 %v1367, %v1655
      %v1657 = vpop.f32.mrb[0].mxu0
      %v1658 = vpop.f32.mrb[0].mxu0
      %v1659 = vadd.f32 %v1370, %v1658
      %v1660 = vpop.f32.mrb[0].mxu0
      %1661 = vmatprep.mubr.bf16.mxu0 %v1193
      %1662 = vmatmul.mubr.bf16.gmra.mrb[0].mxu0 %v811
      %v1663 = vpop.f32.mrb[0].mxu0
      %v1664 = vadd.f32 %v1375, %v1663
      %v1665 = vpop.f32.mrb[0].mxu0
      %v1666 = vpop.f32.mrb[0].mxu0
      %v1667 = vadd.f32 %v1378, %v1666
      %v1668 = vpop.f32.mrb[0].mxu0
      %1669 = vmatprep.mubr.bf16.mxu0 %v1196
      %1670 = vmatmul.mubr.bf16.gmra.mrb[0].mxu0 %v815
      %v1671 = vpop.f32.mrb[0].mxu0
      %v1672 = vadd.f32 %v1383, %v1671
      %v1673 = vpop.f32.mrb[0].mxu0
      %v1674 = vpop.f32.mrb[0].mxu0
      %v1675 = vadd.f32 %v1386, %v1674
      %v1676 = vpop.f32.mrb[0].mxu0
      %1677 = vmatprep.mubr.bf16.mxu0 %v1199
      %1678 = vmatmul.mubr.bf16.gmra.mrb[0].mxu0 %v819
      %v1679 = vpop.f32.mrb[0].mxu0
      %v1680 = vadd.f32 %v1391, %v1679
      %v1681 = vpop.f32.mrb[0].mxu0
      %v1682 = vpop.f32.mrb[0].mxu0
      %v1683 = vadd.f32 %v1394, %v1682
      %v1684 = vpop.f32.mrb[0].mxu0
      %1685 = vmatprep.mubr.bf16.mxu0 %v1202
      %1686 = vmatmul.mubr.bf16.gmra.mrb[0].mxu0 %v823
      %v1687 = vpop.f32.mrb[0].mxu0
      %v1688 = vadd.f32 %v1399, %v1687
      %v1689 = vpop.f32.mrb[0].mxu0
      %v1690 = vpop.f32.mrb[0].mxu0
      %v1691 = vadd.f32 %v1402, %v1690
      %v1692 = vpop.f32.mrb[0].mxu0
      %1693 = vmatprep.mubr.bf16.mxu0 %v1205
      %1694 = vmatmul.mubr.bf16.gmra.mrb[0].mxu0 %v827
      %v1695 = vpop.f32.mrb[0].mxu0
      %v1696 = vadd.f32 %v1407, %v1695
      %v1697 = vpop.f32.mrb[0].mxu0
      %v1698 = vpop.f32.mrb[0].mxu0
      %v1699 = vadd.f32 %v1410, %v1698
      %v1700 = vpop.f32.mrb[0].mxu0
      %1701 = vmatprep.mubr.bf16.mxu0 %v1208
      %1702 = vmatmul.mubr.bf16.gmra.mrb[0].mxu0 %v831
      %v1703 = vpop.f32.mrb[0].mxu0
      %v1704 = vadd.f32 %v1415, %v1703
      %v1705 = vpop.f32.mrb[0].mxu0
      %v1706 = vpop.f32.mrb[0].mxu0
      %v1707 = vadd.f32 %v1418, %v1706
      %v1708 = vpop.f32.mrb[0].mxu0
      %1709 = vmatprep.mubr.bf16.mxu0 %v1211
      %1710 = vmatmul.mubr.bf16.gmra.mrb[0].mxu0 %v835
      %v1711 = vpop.f32.mrb[0].mxu0
      %v1712 = vadd.f32 %v1423, %v1711
      %v1713 = vpop.f32.mrb[0].mxu0
      %v1714 = vpop.f32.mrb[0].mxu0
      %v1715 = vadd.f32 %v1426, %v1714
      %v1716 = vpop.f32.mrb[0].mxu0
      %1717 = vmatprep.mubr.bf16.mxu0 %v1214
      %1718 = vmatmul.mubr.bf16.gmra.mrb[0].mxu0 %v839
      %v1719 = vpop.f32.mrb[0].mxu0
      %v1720 = vadd.f32 %v1431, %v1719
      %v1721 = vpop.f32.mrb[0].mxu0
      %v1722 = vpop.f32.mrb[0].mxu0
      %v1723 = vadd.f32 %v1434, %v1722
      %v1724 = vpop.f32.mrb[0].mxu0
      %1725 = vmatprep.mubr.bf16.mxu0 %v1217
      %1726 = vmatmul.mubr.bf16.gmra.mrb[0].mxu0 %v843
      %v1727 = vpop.f32.mrb[0].mxu0
      %v1728 = vadd.f32 %v1439, %v1727
      %v1729 = vpop.f32.mrb[0].mxu0
      %v1730 = vpop.f32.mrb[0].mxu0
      %v1731 = vadd.f32 %v1442, %v1730
      %v1732 = vpop.f32.mrb[0].mxu0
      %1733 = vmatprep.mubr.bf16.mxu0 %v1220
      %1734 = vmatmul.mubr.bf16.gmra.mrb[0].mxu0 %v847
      %v1735 = vpop.f32.mrb[0].mxu0
      %v1736 = vadd.f32 %v1447, %v1735
      %v1737 = vpop.f32.mrb[0].mxu0
      %v1738 = vpop.f32.mrb[0].mxu0
      %v1739 = vadd.f32 %v1450, %v1738
      %v1740 = vpop.f32.mrb[0].mxu0
      %1741 = vmatprep.mubr.bf16.mxu0 %v1223
      %1742 = vmatmul.mubr.bf16.gmra.mrb[0].mxu0 %v851
      %v1743 = vpop.f32.mrb[0].mxu0
      %v1744 = vadd.f32 %v1455, %v1743
      %v1745 = vpop.f32.mrb[0].mxu0
      %v1746 = vpop.f32.mrb[0].mxu0
      %v1747 = vadd.f32 %v1458, %v1746
      %v1748 = vpop.f32.mrb[0].mxu0
      %1749 = vmatprep.mubr.bf16.mxu0 %v1226
      %1750 = vmatmul.mubr.bf16.gmra.mrb[0].mxu0 %v855
      %v1751 = vpop.f32.mrb[0].mxu0
      %v1752 = vadd.f32 %v1463, %v1751
      %v1753 = vpop.f32.mrb[0].mxu0
      %v1754 = vpop.f32.mrb[0].mxu0
      %v1755 = vadd.f32 %v1466, %v1754
      %v1756 = vpop.f32.mrb[0].mxu0
      %1757 = vmatprep.mubr.bf16.mxu0 %v1229
      %1758 = vmatmul.mubr.bf16.gmra.mrb[0].mxu0 %v859
      %v1759 = vpop.f32.mrb[0].mxu0
      %v1760 = vadd.f32 %v1471, %v1759
      %v1761 = vpop.f32.mrb[0].mxu0
      %v1762 = vpop.f32.mrb[0].mxu0
      %v1763 = vadd.f32 %v1474, %v1762
      %v1764 = vpop.f32.mrb[0].mxu0
      %1765 = vmatprep.mubr.bf16.mxu0 %v1232
      %1766 = vmatmul.mubr.bf16.gmra.mrb[0].mxu0 %v863
      %v1767 = vpop.f32.mrb[0].mxu0
      %v1768 = vadd.f32 %v1479, %v1767
      %v1769 = vpop.f32.mrb[0].mxu0
      %v1770 = vpop.f32.mrb[0].mxu0
      %v1771 = vadd.f32 %v1482, %v1770
      %v1772 = vpop.f32.mrb[0].mxu0
      %1773 = vmatprep.mubr.bf16.mxu0 %v1235
      %1774 = vmatmul.mubr.bf16.gmra.mrb[0].mxu0 %v867
      %v1775 = vpop.f32.mrb[0].mxu0
      %v1776 = vadd.f32 %v1487, %v1775
      %v1777 = vpop.f32.mrb[0].mxu0
      %v1778 = vpop.f32.mrb[0].mxu0
      %v1779 = vadd.f32 %v1490, %v1778
      %v1780 = vpop.f32.mrb[0].mxu0
      %1781 = vmatprep.mubr.bf16.mxu0 %v1238
      %1782 = vmatmul.mubr.bf16.gmra.mrb[0].mxu0 %v871
      %v1783 = vpop.f32.mrb[0].mxu0
      %v1784 = vadd.f32 %v1495, %v1783
      %v1785 = vpop.f32.mrb[0].mxu0
      %v1786 = vpop.f32.mrb[0].mxu0
      %v1787 = vadd.f32 %v1498, %v1786
      %v1788 = vpop.f32.mrb[0].mxu0
      %1789 = vmatprep.mubr.bf16.mxu0 %v1241
      %1790 = vmatmul.mubr.bf16.gmra.mrb[0].mxu0 %v875
      %v1791 = vpop.f32.mrb[0].mxu0
      %v1792 = vadd.f32 %v1503, %v1791
      %v1793 = vpop.f32.mrb[0].mxu0
      %v1794 = vpop.f32.mrb[0].mxu0
      %v1795 = vadd.f32 %v1506, %v1794
      %v1796 = vpop.f32.mrb[0].mxu0
      %1797 = vmatprep.mubr.bf16.mxu0 %v1244
      %1798 = vmatmul.mubr.bf16.gmra.mrb[0].mxu0 %v879
      %v1799 = vpop.f32.mrb[0].mxu0
      %v1800 = vadd.f32 %v1511, %v1799
      %v1801 = vpop.f32.mrb[0].mxu0
      %v1802 = vpop.f32.mrb[0].mxu0
      %v1803 = vadd.f32 %v1514, %v1802
      %v1804 = vpop.f32.mrb[0].mxu0
      %1805 = vmatprep.mubr.bf16.mxu0 %v1247
      %1806 = vmatmul.mubr.bf16.gmra.mrb[0].mxu0 %v883
      %v1807 = vpop.f32.mrb[0].mxu0
      %v1808 = vadd.f32 %v1519, %v1807
      %v1809 = vpop.f32.mrb[0].mxu0
      %v1810 = vpop.f32.mrb[0].mxu0
      %v1811 = vadd.f32 %v1522, %v1810
      %v1812 = vpop.f32.mrb[0].mxu0
      %1813 = vmatprep.mubr.bf16.mxu0 %v1250
      %1814 = vmatmul.mubr.bf16.gmra.mrb[0].mxu0 %v887
      %v1815 = vpop.f32.mrb[0].mxu0
      %v1816 = vadd.f32 %v1527, %v1815
      %v1817 = vpop.f32.mrb[0].mxu0
      %v1818 = vpop.f32.mrb[0].mxu0
      %v1819 = vadd.f32 %v1530, %v1818
      %v1820 = vpop.f32.mrb[0].mxu0
      %1821 = vmatprep.mubr.bf16.mxu0 %v1253
      %1822 = vmatmul.mubr.bf16.gmra.mrb[0].mxu0 %v891
      %v1823 = vpop.f32.mrb[0].mxu0
      %v1824 = vadd.f32 %v1535, %v1823
      %v1825 = vpop.f32.mrb[0].mxu0
      %v1826 = vpop.f32.mrb[0].mxu0
      %v1827 = vadd.f32 %v1538, %v1826
      %v1828 = vpop.f32.mrb[0].mxu0
      %1829 = vmatprep.mubr.bf16.mxu0 %v1256
      %1830 = vmatmul.mubr.bf16.gmra.mrb[0].mxu0 %v895
      %v1831 = vpop.f32.mrb[0].mxu0
      %v1832 = vadd.f32 %v1543, %v1831
      %v1833 = vpop.f32.mrb[0].mxu0
      %v1834 = vpop.f32.mrb[0].mxu0
      %v1835 = vadd.f32 %v1546, %v1834
      %v1836 = vpop.f32.mrb[0].mxu0
      %1837 = vmatprep.mubr.bf16.mxu0 %v1259
      %1838 = vmatmul.mubr.bf16.gmra.mrb[0].mxu0 %v899
      %v1839 = vpop.f32.mrb[0].mxu0
      %v1840 = vadd.f32 %v1551, %v1839
      %v1841 = vpop.f32.mrb[0].mxu0
      %v1842 = vpop.f32.mrb[0].mxu0
      %v1843 = vadd.f32 %v1554, %v1842
      %v1844 = vpop.f32.mrb[0].mxu0
      %1845 = vdwg.mxu0
      %v1846 = vld [vmem:[%s2] sm:$0x1]
      %v1848 = vlaneseq
      %v1849 = vshrl.u32 %v1848, 7
      %v1850 = vsub.s32 0, %v1849
      %v1851 = vrot.slane %v1846, %v1850
      %v1853 = vmul.f32 %v1592, %v1851
      %v1854 = vmul.f32 %v1595, %v1851
      %v1855 = vmul.f32 %v1600, %v1851
      %v1856 = vmul.f32 %v1603, %v1851
      %v1857 = vmul.f32 %v1608, %v1851
      %v1858 = vmul.f32 %v1611, %v1851
      %v1859 = vmul.f32 %v1616, %v1851
      %v1860 = vmul.f32 %v1619, %v1851
      %v1861 = vmul.f32 %v1624, %v1851
      %v1862 = vmul.f32 %v1627, %v1851
      %v1863 = vmul.f32 %v1632, %v1851
      %v1864 = vmul.f32 %v1635, %v1851
      %v1865 = vmul.f32 %v1640, %v1851
      %v1866 = vmul.f32 %v1643, %v1851
      %v1867 = vmul.f32 %v1648, %v1851
      %v1868 = vmul.f32 %v1651, %v1851
      %v1869 = vmul.f32 %v1656, %v1851
      %v1870 = vmul.f32 %v1659, %v1851
      %v1871 = vmul.f32 %v1664, %v1851
      %v1872 = vmul.f32 %v1667, %v1851
      %v1873 = vmul.f32 %v1672, %v1851
      %v1874 = vmul.f32 %v1675, %v1851
      %v1875 = vmul.f32 %v1680, %v1851
      %v1876 = vmul.f32 %v1683, %v1851
      %v1877 = vmul.f32 %v1688, %v1851
      %v1878 = vmul.f32 %v1691, %v1851
      %v1879 = vmul.f32 %v1696, %v1851
      %v1880 = vmul.f32 %v1699, %v1851
      %v1881 = vmul.f32 %v1704, %v1851
      %v1882 = vmul.f32 %v1707, %v1851
      %v1883 = vmul.f32 %v1712, %v1851
      %v1884 = vmul.f32 %v1715, %v1851
      %v1885 = vmul.f32 %v1720, %v1851
      %v1886 = vmul.f32 %v1723, %v1851
      %v1887 = vmul.f32 %v1728, %v1851
      %v1888 = vmul.f32 %v1731, %v1851
      %v1889 = vmul.f32 %v1736, %v1851
      %v1890 = vmul.f32 %v1739, %v1851
      %v1891 = vmul.f32 %v1744, %v1851
      %v1892 = vmul.f32 %v1747, %v1851
      %v1893 = vmul.f32 %v1752, %v1851
      %v1894 = vmul.f32 %v1755, %v1851
      %v1895 = vmul.f32 %v1760, %v1851
      %v1896 = vmul.f32 %v1763, %v1851
      %v1897 = vmul.f32 %v1768, %v1851
      %v1898 = vmul.f32 %v1771, %v1851
      %v1899 = vmul.f32 %v1776, %v1851
      %v1900 = vmul.f32 %v1779, %v1851
      %v1901 = vmul.f32 %v1784, %v1851
      %v1902 = vmul.f32 %v1787, %v1851
      %v1903 = vmul.f32 %v1792, %v1851
      %v1904 = vmul.f32 %v1795, %v1851
      %v1905 = vmul.f32 %v1800, %v1851
      %v1906 = vmul.f32 %v1803, %v1851
      %v1907 = vmul.f32 %v1808, %v1851
      %v1908 = vmul.f32 %v1811, %v1851
      %v1909 = vmul.f32 %v1816, %v1851
      %v1910 = vmul.f32 %v1819, %v1851
      %v1911 = vmul.f32 %v1824, %v1851
      %v1912 = vmul.f32 %v1827, %v1851
      %v1913 = vmul.f32 %v1832, %v1851
      %v1914 = vmul.f32 %v1835, %v1851
      %v1915 = vmul.f32 %v1840, %v1851
      %v1916 = vmul.f32 %v1843, %v1851
      %v1917 = vld [vmem:[%s3] sm:$0x1]
      %v1919 = vlaneseq
      %v1920 = vshrl.u32 %v1919, 7
      %v1921 = vsub.s32 0, %v1920
      %v1922 = vrot.slane %v1917, %v1921
      %v1924 = vadd.f32 %v1853, %v1922
      %v1925 = vadd.f32 %v1854, %v1922
      %v1926 = vadd.f32 %v1855, %v1922
      %v1927 = vadd.f32 %v1856, %v1922
      %v1928 = vadd.f32 %v1857, %v1922
      %v1929 = vadd.f32 %v1858, %v1922
      %v1930 = vadd.f32 %v1859, %v1922
      %v1931 = vadd.f32 %v1860, %v1922
      %v1932 = vadd.f32 %v1861, %v1922
      %v1933 = vadd.f32 %v1862, %v1922
      %v1934 = vadd.f32 %v1863, %v1922
      %v1935 = vadd.f32 %v1864, %v1922
      %v1936 = vadd.f32 %v1865, %v1922
      %v1937 = vadd.f32 %v1866, %v1922
      %v1938 = vadd.f32 %v1867, %v1922
      %v1939 = vadd.f32 %v1868, %v1922
      %v1940 = vadd.f32 %v1869, %v1922
      %v1941 = vadd.f32 %v1870, %v1922
      %v1942 = vadd.f32 %v1871, %v1922
      %v1943 = vadd.f32 %v1872, %v1922
      %v1944 = vadd.f32 %v1873, %v1922
      %v1945 = vadd.f32 %v1874, %v1922
      %v1946 = vadd.f32 %v1875, %v1922
      %v1947 = vadd.f32 %v1876, %v1922
      %v1948 = vadd.f32 %v1877, %v1922
      %v1949 = vadd.f32 %v1878, %v1922
      %v1950 = vadd.f32 %v1879, %v1922
      %v1951 = vadd.f32 %v1880, %v1922
      %v1952 = vadd.f32 %v1881, %v1922
      %v1953 = vadd.f32 %v1882, %v1922
      %v1954 = vadd.f32 %v1883, %v1922
      %v1955 = vadd.f32 %v1884, %v1922
      %v1956 = vadd.f32 %v1885, %v1922
      %v1957 = vadd.f32 %v1886, %v1922
      %v1958 = vadd.f32 %v1887, %v1922
      %v1959 = vadd.f32 %v1888, %v1922
      %v1960 = vadd.f32 %v1889, %v1922
      %v1961 = vadd.f32 %v1890, %v1922
      %v1962 = vadd.f32 %v1891, %v1922
      %v1963 = vadd.f32 %v1892, %v1922
      %v1964 = vadd.f32 %v1893, %v1922
      %v1965 = vadd.f32 %v1894, %v1922
      %v1966 = vadd.f32 %v1895, %v1922
      %v1967 = vadd.f32 %v1896, %v1922
      %v1968 = vadd.f32 %v1897, %v1922
      %v1969 = vadd.f32 %v1898, %v1922
      %v1970 = vadd.f32 %v1899, %v1922
      %v1971 = vadd.f32 %v1900, %v1922
      %v1972 = vadd.f32 %v1901, %v1922
      %v1973 = vadd.f32 %v1902, %v1922
      %v1974 = vadd.f32 %v1903, %v1922
      %v1975 = vadd.f32 %v1904, %v1922
      %v1976 = vadd.f32 %v1905, %v1922
      %v1977 = vadd.f32 %v1906, %v1922
      %v1978 = vadd.f32 %v1907, %v1922
      %v1979 = vadd.f32 %v1908, %v1922
      %v1980 = vadd.f32 %v1909, %v1922
      %v1981 = vadd.f32 %v1910, %v1922
      %v1982 = vadd.f32 %v1911, %v1922
      %v1983 = vadd.f32 %v1912, %v1922
      %v1984 = vadd.f32 %v1913, %v1922
      %v1985 = vadd.f32 %v1914, %v1922
      %v1986 = vadd.f32 %v1915, %v1922
      %v1987 = vadd.f32 %v1916, %v1922
      %v1988 = vmax.f32 %v1924, 0.0
      %v1989 = vmax.f32 %v1925, 0.0
      %v1990 = vmax.f32 %v1926, 0.0
      %v1991 = vmax.f32 %v1927, 0.0
      %v1992 = vmax.f32 %v1928, 0.0
      %v1993 = vmax.f32 %v1929, 0.0
      %v1994 = vmax.f32 %v1930, 0.0
      %v1995 = vmax.f32 %v1931, 0.0
      %v1996 = vmax.f32 %v1932, 0.0
      %v1997 = vmax.f32 %v1933, 0.0
      %v1998 = vmax.f32 %v1934, 0.0
      %v1999 = vmax.f32 %v1935, 0.0
      %v2000 = vmax.f32 %v1936, 0.0
      %v2001 = vmax.f32 %v1937, 0.0
      %v2002 = vmax.f32 %v1938, 0.0
      %v2003 = vmax.f32 %v1939, 0.0
      %v2004 = vmax.f32 %v1940, 0.0
      %v2005 = vmax.f32 %v1941, 0.0
      %v2006 = vmax.f32 %v1942, 0.0
      %v2007 = vmax.f32 %v1943, 0.0
      %v2008 = vmax.f32 %v1944, 0.0
      %v2009 = vmax.f32 %v1945, 0.0
      %v2010 = vmax.f32 %v1946, 0.0
      %v2011 = vmax.f32 %v1947, 0.0
      %v2012 = vmax.f32 %v1948, 0.0
      %v2013 = vmax.f32 %v1949, 0.0
      %v2014 = vmax.f32 %v1950, 0.0
      %v2015 = vmax.f32 %v1951, 0.0
      %v2016 = vmax.f32 %v1952, 0.0
      %v2017 = vmax.f32 %v1953, 0.0
      %v2018 = vmax.f32 %v1954, 0.0
      %v2019 = vmax.f32 %v1955, 0.0
      %v2020 = vmax.f32 %v1956, 0.0
      %v2021 = vmax.f32 %v1957, 0.0
      %v2022 = vmax.f32 %v1958, 0.0
      %v2023 = vmax.f32 %v1959, 0.0
      %v2024 = vmax.f32 %v1960, 0.0
      %v2025 = vmax.f32 %v1961, 0.0
      %v2026 = vmax.f32 %v1962, 0.0
      %v2027 = vmax.f32 %v1963, 0.0
      %v2028 = vmax.f32 %v1964, 0.0
      %v2029 = vmax.f32 %v1965, 0.0
      %v2030 = vmax.f32 %v1966, 0.0
      %v2031 = vmax.f32 %v1967, 0.0
      %v2032 = vmax.f32 %v1968, 0.0
      %v2033 = vmax.f32 %v1969, 0.0
      %v2034 = vmax.f32 %v1970, 0.0
      %v2035 = vmax.f32 %v1971, 0.0
      %v2036 = vmax.f32 %v1972, 0.0
      %v2037 = vmax.f32 %v1973, 0.0
      %v2038 = vmax.f32 %v1974, 0.0
      %v2039 = vmax.f32 %v1975, 0.0
      %v2040 = vmax.f32 %v1976, 0.0
      %v2041 = vmax.f32 %v1977, 0.0
      %v2042 = vmax.f32 %v1978, 0.0
      %v2043 = vmax.f32 %v1979, 0.0
      %v2044 = vmax.f32 %v1980, 0.0
      %v2045 = vmax.f32 %v1981, 0.0
      %v2046 = vmax.f32 %v1982, 0.0
      %v2047 = vmax.f32 %v1983, 0.0
      %v2048 = vmax.f32 %v1984, 0.0
      %v2049 = vmax.f32 %v1985, 0.0
      %v2050 = vmax.f32 %v1986, 0.0
      %v2051 = vmax.f32 %v1987, 0.0
      %vm2052 = vcmask 523264
      %2053 = vst.msk [vmem:[%s202] sm:$0xff] %vm2052, %v1988
      %2054 = vst.msk [vmem:[%s202 + $0x8] sm:$0xff] %vm2052, %v1989
      %2055 = vst.msk [vmem:[%s202 + $0x10] sm:$0xff] %vm2052, %v1990
      %2056 = vst.msk [vmem:[%s202 + $0x18] sm:$0xff] %vm2052, %v1991
      %2057 = vst.msk [vmem:[%s202 + $0x20] sm:$0xff] %vm2052, %v1992
      %2058 = vst.msk [vmem:[%s202 + $0x28] sm:$0xff] %vm2052, %v1993
      %2059 = vst.msk [vmem:[%s202 + $0x30] sm:$0xff] %vm2052, %v1994
      %2060 = vst.msk [vmem:[%s202 + $0x38] sm:$0xff] %vm2052, %v1995
      %2061 = vst.msk [vmem:[%s202 + $0x40] sm:$0xff] %vm2052, %v1996
      %2062 = vst.msk [vmem:[%s202 + $0x48] sm:$0xff] %vm2052, %v1997
      %2063 = vst.msk [vmem:[%s202 + $0x50] sm:$0xff] %vm2052, %v1998
      %2064 = vst.msk [vmem:[%s202 + $0x58] sm:$0xff] %vm2052, %v1999
      %2065 = vst.msk [vmem:[%s202 + $0x60] sm:$0xff] %vm2052, %v2000
      %2066 = vst.msk [vmem:[%s202 + $0x68] sm:$0xff] %vm2052, %v2001
      %2067 = vst.msk [vmem:[%s202 + $0x70] sm:$0xff] %vm2052, %v2002
      %2068 = vst.msk [vmem:[%s202 + $0x78] sm:$0xff] %vm2052, %v2003
      %2069 = vst.msk [vmem:[%s202 + $0x80] sm:$0xff] %vm2052, %v2004
      %2070 = vst.msk [vmem:[%s202 + $0x88] sm:$0xff] %vm2052, %v2005
      %2071 = vst.msk [vmem:[%s202 + $0x90] sm:$0xff] %vm2052, %v2006
      %2072 = vst.msk [vmem:[%s202 + $0x98] sm:$0xff] %vm2052, %v2007
      %2073 = vst.msk [vmem:[%s202 + $0xa0] sm:$0xff] %vm2052, %v2008
      %2074 = vst.msk [vmem:[%s202 + $0xa8] sm:$0xff] %vm2052, %v2009
      %2075 = vst.msk [vmem:[%s202 + $0xb0] sm:$0xff] %vm2052, %v2010
      %2076 = vst.msk [vmem:[%s202 + $0xb8] sm:$0xff] %vm2052, %v2011
      %2077 = vst.msk [vmem:[%s202 + $0xc0] sm:$0xff] %vm2052, %v2012
      %2078 = vst.msk [vmem:[%s202 + $0xc8] sm:$0xff] %vm2052, %v2013
      %2079 = vst.msk [vmem:[%s202 + $0xd0] sm:$0xff] %vm2052, %v2014
      %2080 = vst.msk [vmem:[%s202 + $0xd8] sm:$0xff] %vm2052, %v2015
      %2081 = vst.msk [vmem:[%s202 + $0xe0] sm:$0xff] %vm2052, %v2016
      %2082 = vst.msk [vmem:[%s202 + $0xe8] sm:$0xff] %vm2052, %v2017
      %2083 = vst.msk [vmem:[%s202 + $0xf0] sm:$0xff] %vm2052, %v2018
      %2084 = vst.msk [vmem:[%s202 + $0xf8] sm:$0xff] %vm2052, %v2019
      %2085 = vst.msk [vmem:[%s202 + $0x100] sm:$0xff] %vm2052, %v2020
      %2086 = vst.msk [vmem:[%s202 + $0x108] sm:$0xff] %vm2052, %v2021
      %2087 = vst.msk [vmem:[%s202 + $0x110] sm:$0xff] %vm2052, %v2022
      %2088 = vst.msk [vmem:[%s202 + $0x118] sm:$0xff] %vm2052, %v2023
      %2089 = vst.msk [vmem:[%s202 + $0x120] sm:$0xff] %vm2052, %v2024
      %2090 = vst.msk [vmem:[%s202 + $0x128] sm:$0xff] %vm2052, %v2025
      %2091 = vst.msk [vmem:[%s202 + $0x130] sm:$0xff] %vm2052, %v2026
      %2092 = vst.msk [vmem:[%s202 + $0x138] sm:$0xff] %vm2052, %v2027
      %2093 = vst.msk [vmem:[%s202 + $0x140] sm:$0xff] %vm2052, %v2028
      %2094 = vst.msk [vmem:[%s202 + $0x148] sm:$0xff] %vm2052, %v2029
      %2095 = vst.msk [vmem:[%s202 + $0x150] sm:$0xff] %vm2052, %v2030
      %2096 = vst.msk [vmem:[%s202 + $0x158] sm:$0xff] %vm2052, %v2031
      %2097 = vst.msk [vmem:[%s202 + $0x160] sm:$0xff] %vm2052, %v2032
      %2098 = vst.msk [vmem:[%s202 + $0x168] sm:$0xff] %vm2052, %v2033
      %2099 = vst.msk [vmem:[%s202 + $0x170] sm:$0xff] %vm2052, %v2034
      %2100 = vst.msk [vmem:[%s202 + $0x178] sm:$0xff] %vm2052, %v2035
      %2101 = vst.msk [vmem:[%s202 + $0x180] sm:$0xff] %vm2052, %v2036
      %2102 = vst.msk [vmem:[%s202 + $0x188] sm:$0xff] %vm2052, %v2037
      %2103 = vst.msk [vmem:[%s202 + $0x190] sm:$0xff] %vm2052, %v2038
      %2104 = vst.msk [vmem:[%s202 + $0x198] sm:$0xff] %vm2052, %v2039
      %2105 = vst.msk [vmem:[%s202 + $0x1a0] sm:$0xff] %vm2052, %v2040
      %2106 = vst.msk [vmem:[%s202 + $0x1a8] sm:$0xff] %vm2052, %v2041
      %2107 = vst.msk [vmem:[%s202 + $0x1b0] sm:$0xff] %vm2052, %v2042
      %2108 = vst.msk [vmem:[%s202 + $0x1b8] sm:$0xff] %vm2052, %v2043
      %2109 = vst.msk [vmem:[%s202 + $0x1c0] sm:$0xff] %vm2052, %v2044
      %2110 = vst.msk [vmem:[%s202 + $0x1c8] sm:$0xff] %vm2052, %v2045
      %2111 = vst.msk [vmem:[%s202 + $0x1d0] sm:$0xff] %vm2052, %v2046
      %2112 = vst.msk [vmem:[%s202 + $0x1d8] sm:$0xff] %vm2052, %v2047
      %2113 = vst.msk [vmem:[%s202 + $0x1e0] sm:$0xff] %vm2052, %v2048
      %2114 = vst.msk [vmem:[%s202 + $0x1e8] sm:$0xff] %vm2052, %v2049
      %2115 = vst.msk [vmem:[%s202 + $0x1f0] sm:$0xff] %vm2052, %v2050
      %2116 = vst.msk [vmem:[%s202 + $0x1f8] sm:$0xff] %vm2052, %v2051
      %s2117 = smul.u32 64, %s15
      %p2118 = scmp.lt.s32.totalorder %s2117, 255
      %s2119 = scalar_select %p2118, %s2117, 255
      %s2120 = smul.addr %s2119, 8
      %s2121 = scalar_lea.vmem %s4, %s2120
      // Predicated region
      $region37: #{tpu_custom_call.1} parent=35 // pred_check
        %p2122 = pneg %p122
      $region38: #{tpu_custom_call.1} parent=35 // pred_check_branch
        %2124 = sbr.rel (%p2122) target = $region40
      $region39: #{tpu_custom_call.1} parent=35 // pred_region
        %s2125 = smul.u32 64, %s15
      $region40: #{tpu_custom_call.1} parent=35 // pred_fallthru
        _
    $region36: #{tpu_custom_call.1} parent=5 // pred_fallthru
      _
    %p2126 = scmp.le.s32.totalorder 2, %s10
    // Predicated region
    $region41: #{tpu_custom_call.1} parent=5 // pred_check
      %p2127 = pneg %p2126
    $region42: #{tpu_custom_call.1} parent=5 // pred_check_branch
      %2129 = sbr.rel (%p2127) target = $region44
    $region43: #{tpu_custom_call.1} parent=5 // pred_region
      %s2130 = ssub.s32 %s10, 2
      // Predicated region
      $region45: #{tpu_custom_call.1} parent=43 // pred_check
        %p2131 = pneg %p128
      $region46: #{tpu_custom_call.1} parent=43 // pred_check_branch
        %2133 = sbr.rel (%p2131) target = $region48
      $region47: #{tpu_custom_call.1} parent=43 // pred_region
        %s2134 = smul.u32 64, %s16
        %p2135 = scmp.lt.s32.totalorder %s2134, 255
        %s2136 = scalar_select %p2135, %s2134, 255
        %s2137 = smul.addr %s2136, 8
        %s2138 = scalar_lea.vmem %s4, %s2137
      $region48: #{tpu_custom_call.1} parent=43 // pred_fallthru
        _
    $region44: #{tpu_custom_call.1} parent=5 // pred_fallthru
      _
  $region6: #{tpu_custom_call.1} parent=0 // loop_footer
    %s14 = sadd.s32 1, %s10
  $region7: #{tpu_custom_call.1} parent=0 // loop_footer_branch
    %9 = sbr.rel target = $region3
  $region8: #{tpu_custom_call.1} parent=0 // loop_exit
    _

</llo_original>
